<compile_context>
chip_gen: v5e
topology: v5e:2x2
jax: 0.10.0
libtpu: 0.0.40
codegen_flags: <defaults>
</compile_context>

<pallas_src>
import jax
import jax.numpy as jnp
from jax.experimental import pallas as pl
from jax.experimental.pallas import tpu as pltpu


# ---------------------------------------------------------------------------
# Pallas kernel: full 2-layer LSTM recurrence + output projection, one call.
# ---------------------------------------------------------------------------
def _decoder_kernel(x_ref,      # (S, B, I)   full sequence, time-major
                    w0_ref,     # (I+H, 4H)   layer-0 stacked [W_ih; W_hh]^T
                    b0_ref,     # (1, 4H)     layer-0 combined bias
                    w1_ref,     # (2H, 4H)    layer-1 stacked [W_ih; W_hh]^T
                    b1_ref,     # (1, 4H)     layer-1 combined bias
                    wout_ref,   # (H, O)      hidden2label weight (transposed)
                    bout_ref,   # (1, O)      hidden2label bias
                    y_ref):     # (S*B, O)    output, rows ordered t-major (t*B + b)
    S, B, _ = x_ref.shape
    H = w1_ref.shape[0] // 2

    w0 = w0_ref[...]
    b0 = b0_ref[...]
    w1 = w1_ref[...]
    b1 = b1_ref[...]

    def lstm_cell(xh, c, w, b):
        # PyTorch gate ordering: i, f, g, o
        g = jnp.dot(xh, w, preferred_element_type=jnp.float32) + b
        i = jax.nn.sigmoid(g[:, 0 * H:1 * H])
        f = jax.nn.sigmoid(g[:, 1 * H:2 * H])
        gg = jnp.tanh(g[:, 2 * H:3 * H])
        o = jax.nn.sigmoid(g[:, 3 * H:4 * H])
        c_new = f * c + i * gg
        h_new = o * jnp.tanh(c_new)
        return h_new, c_new

    h0 = jnp.zeros((B, H), jnp.float32)
    c0 = jnp.zeros((B, H), jnp.float32)
    h1 = jnp.zeros((B, H), jnp.float32)
    c1 = jnp.zeros((B, H), jnp.float32)

    h1_steps = []
    for t in range(S):                      # S static -> fully unrolled recurrence
        x_t = x_ref[t]                      # (B, I), static leading-dim index
        h0, c0 = lstm_cell(jnp.concatenate([x_t, h0], axis=1), c0, w0, b0)
        h1, c1 = lstm_cell(jnp.concatenate([h0, h1], axis=1), c1, w1, b1)
        h1_steps.append(h1)

    # Hoisted hidden2label: one (S*B, H) @ (H, O) matmul + one bulk store.
    h1_all = jnp.concatenate(h1_steps, axis=0)                       # (S*B, H)
    y = jnp.dot(h1_all, wout_ref[...],
                preferred_element_type=jnp.float32) + bout_ref[...]  # (S*B, O)
    y_ref[...] = y.astype(y_ref.dtype)


# ---------------------------------------------------------------------------
# Wrapper
# ---------------------------------------------------------------------------
@jax.jit
def decoder_forward(x, params):
    """x: (batch, seq, input_size) -> (batch, seq, output_size)."""
    B, S, _ = x.shape
    O = params["wout"].shape[1]

    x_tm = jnp.transpose(x, (1, 0, 2))  # (S, B, I) time-major

    vmem = lambda: pl.BlockSpec(memory_space=pltpu.MemorySpace.VMEM)

    y_flat = pl.pallas_call(
        _decoder_kernel,
        out_shape=jax.ShapeDtypeStruct((S * B, O), jnp.float32),
        in_specs=[vmem() for _ in range(7)],
        out_specs=vmem(),
    )(x_tm,
      params["w0"], params["b0"],
      params["w1"], params["b1"],
      params["wout"], params["bout"])

    # rows are (t*B + b) -> (S, B, O) -> (B, S, O)
    return jnp.transpose(y_flat.reshape(S, B, O), (1, 0, 2))


# ---------------------------------------------------------------------------
# Deterministic parameter init (PyTorch default LSTM init + kaiming linear),
# laid out as pre-stacked / pre-transposed kernel weights.
# ---------------------------------------------------------------------------
def init_params(key, input_size, hidden_dim, output_size):
    I, H, O = input_size, hidden_dim, output_size
    ks = jax.random.split(key, 10)
    bound = 1.0 / jnp.sqrt(H)
    u = lambda k, shape, b: jax.random.uniform(k, shape, jnp.float32, -b, b)

    # layer 0
    wih0 = u(ks[0], (4 * H, I), bound)
    whh0 = u(ks[1], (4 * H, H), bound)
    bih0 = u(ks[2], (4 * H,), bound)
    bhh0 = u(ks[3], (4 * H,), bound)
    # layer 1
    wih1 = u(ks[4], (4 * H, H), bound)
    whh1 = u(ks[5], (4 * H, H), bound)
    bih1 = u(ks[6], (4 * H,), bound)
    bhh1 = u(ks[7], (4 * H,), bound)
    # hidden2label: kaiming_uniform_(fan_in, relu) => bound = sqrt(6 / fan_in)
    wout = jax.random.uniform(ks[8], (O, H), jnp.float32,
                              -jnp.sqrt(6.0 / H), jnp.sqrt(6.0 / H))
    bout = u(ks[9], (O,), 1.0 / jnp.sqrt(H))

    return {
        # fused gate matmul:  gates = [x, h] @ w + b
        "w0": jnp.concatenate([wih0.T, whh0.T], axis=0),   # (I+H, 4H)
        "b0": (bih0 + bhh0)[None, :],                      # (1, 4H)
        "w1": jnp.concatenate([wih1.T, whh1.T], axis=0),   # (2H, 4H)
        "b1": (bih1 + bhh1)[None, :],                      # (1, 4H)
        "wout": wout.T,                                    # (H, O)
        "bout": bout[None, :],                             # (1, O)
    }


# ---------------------------------------------------------------------------
# Pure-JAX reference (correctness check only)
# ---------------------------------------------------------------------------
def decoder_reference(x, params):
    B, S, _ = x.shape
    H = params["w1"].shape[0] // 2

    def cell(x_in, h, c, w, b):
        g = jnp.concatenate([x_in, h], axis=1) @ w + b
        i = jax.nn.sigmoid(g[:, :H])
        f = jax.nn.sigmoid(g[:, H:2 * H])
        gg = jnp.tanh(g[:, 2 * H:3 * H])
        o = jax.nn.sigmoid(g[:, 3 * H:])
        c = f * c + i * gg
        return o * jnp.tanh(c), c

    def step(carry, x_t):
        h0, c0, h1, c1 = carry
        h0, c0 = cell(x_t, h0, c0, params["w0"], params["b0"])
        h1, c1 = cell(h0, h1, c1, params["w1"], params["b1"])
        y = h1 @ params["wout"] + params["bout"]
        return (h0, c0, h1, c1), y

    z = jnp.zeros((B, H), jnp.float32)
    _, ys = jax.lax.scan(step, (z, z, z, z), jnp.transpose(x, (1, 0, 2)))
    return jnp.transpose(ys, (1, 0, 2))


if __name__ == "__main__":
    # Decoder(input_size=16, hidden_dim=32, output_size=8, NUM_LAYERS=2)
    B, S, I, H, O = 2, 8, 16, 32, 8

    key = jax.random.PRNGKey(0)
    k_x, k_p = jax.random.split(key)
    x = jax.random.normal(k_x, (B, S, I), dtype=jnp.float32)
    params = init_params(k_p, I, H, O)

    y = decoder_forward(x, params)
    y = jax.block_until_ready(y)

    y_ref = decoder_reference(x, params)
    assert y.shape == (B, S, O)
    assert jnp.allclose(y, y_ref, atol=1e-5, rtol=1e-5)

    print("KERNEL_OK")
</pallas_src>

<mosaic_0001>
module attributes {stable_mosaic.version = 11 : i64} {
  func.func @_decoder_kernel(%arg0: memref<8x2x16xf32, #tpu.memory_space<vmem>>, %arg1: memref<48x128xf32, #tpu.memory_space<vmem>>, %arg2: memref<1x128xf32, #tpu.memory_space<vmem>>, %arg3: memref<64x128xf32, #tpu.memory_space<vmem>>, %arg4: memref<1x128xf32, #tpu.memory_space<vmem>>, %arg5: memref<32x8xf32, #tpu.memory_space<vmem>>, %arg6: memref<1x8xf32, #tpu.memory_space<vmem>>, %arg7: memref<16x8xf32, #tpu.memory_space<vmem>>) attributes {dimension_semantics = [], scalar_prefetch = 0 : i64, scratch_operands = 0 : i64, tpu.core_type = #tpu.core_type<tc>} {
    %c0 = arith.constant 0 : index
    %c0_0 = arith.constant 0 : index
    %0 = vector.load %arg1[%c0, %c0_0] : memref<48x128xf32, #tpu.memory_space<vmem>>, vector<48x128xf32>
    %c0_1 = arith.constant 0 : index
    %c0_2 = arith.constant 0 : index
    %1 = vector.load %arg2[%c0_1, %c0_2] : memref<1x128xf32, #tpu.memory_space<vmem>>, vector<1x128xf32>
    %c0_3 = arith.constant 0 : index
    %c0_4 = arith.constant 0 : index
    %2 = vector.load %arg3[%c0_3, %c0_4] : memref<64x128xf32, #tpu.memory_space<vmem>>, vector<64x128xf32>
    %c0_5 = arith.constant 0 : index
    %c0_6 = arith.constant 0 : index
    %3 = vector.load %arg4[%c0_5, %c0_6] : memref<1x128xf32, #tpu.memory_space<vmem>>, vector<1x128xf32>
    %cst = arith.constant 0.000000e+00 : f32
    %4 = vector.broadcast %cst : f32 to vector<2x32xf32>
    %cst_7 = arith.constant 0.000000e+00 : f32
    %5 = vector.broadcast %cst_7 : f32 to vector<2x32xf32>
    %cst_8 = arith.constant 0.000000e+00 : f32
    %6 = vector.broadcast %cst_8 : f32 to vector<2x32xf32>
    %cst_9 = arith.constant 0.000000e+00 : f32
    %7 = vector.broadcast %cst_9 : f32 to vector<2x32xf32>
    %c0_10 = arith.constant 0 : index
    %c0_11 = arith.constant 0 : index
    %c0_12 = arith.constant 0 : index
    %8 = vector.load %arg0[%c0_10, %c0_11, %c0_12] : memref<8x2x16xf32, #tpu.memory_space<vmem>>, vector<1x2x16xf32>
    %9 = vector.shape_cast %8 : vector<1x2x16xf32> to vector<2x16xf32>
    %10 = tpu.concatenate %9, %4 in 1 : vector<2x16xf32>, vector<2x32xf32> -> vector<2x48xf32>
    %cst_13 = arith.constant dense<0.000000e+00> : vector<2x128xf32>
    %11 = tpu.matmul %10, %0, %cst_13 {dimension_numbers = #tpu.dot_dimension_numbers<[1], [0], [0], [1], [0, 0, 1, 1], [], []>} : vector<2x48xf32>, vector<48x128xf32>, vector<2x128xf32> -> vector<2x128xf32>
    %12 = vector.broadcast %1 : vector<1x128xf32> to vector<2x128xf32>
    %13 = arith.addf %11, %12 : vector<2x128xf32>
    %14 = vector.extract_strided_slice %13 {offsets = [0, 0], sizes = [2, 32], strides = [1, 1]} : vector<2x128xf32> to vector<2x32xf32>
    %15 = arith.negf %14 : vector<2x32xf32>
    %16 = math.exp %15 : vector<2x32xf32>
    %cst_14 = arith.constant 1.000000e+00 : f32
    %17 = vector.broadcast %cst_14 : f32 to vector<2x32xf32>
    %18 = arith.addf %17, %16 : vector<2x32xf32>
    %19 = arith.divf %17, %18 : vector<2x32xf32>
    %20 = vector.extract_strided_slice %13 {offsets = [0, 32], sizes = [2, 32], strides = [1, 1]} : vector<2x128xf32> to vector<2x32xf32>
    %21 = arith.negf %20 : vector<2x32xf32>
    %22 = math.exp %21 : vector<2x32xf32>
    %cst_15 = arith.constant 1.000000e+00 : f32
    %23 = vector.broadcast %cst_15 : f32 to vector<2x32xf32>
    %24 = arith.addf %23, %22 : vector<2x32xf32>
    %25 = arith.divf %23, %24 : vector<2x32xf32>
    %26 = vector.extract_strided_slice %13 {offsets = [0, 64], sizes = [2, 32], strides = [1, 1]} : vector<2x128xf32> to vector<2x32xf32>
    %27 = math.tanh %26 : vector<2x32xf32>
    %28 = vector.extract_strided_slice %13 {offsets = [0, 96], sizes = [2, 32], strides = [1, 1]} : vector<2x128xf32> to vector<2x32xf32>
    %29 = arith.negf %28 : vector<2x32xf32>
    %30 = math.exp %29 : vector<2x32xf32>
    %cst_16 = arith.constant 1.000000e+00 : f32
    %31 = vector.broadcast %cst_16 : f32 to vector<2x32xf32>
    %32 = arith.addf %31, %30 : vector<2x32xf32>
    %33 = arith.divf %31, %32 : vector<2x32xf32>
    %34 = arith.mulf %25, %5 : vector<2x32xf32>
    %35 = arith.mulf %19, %27 : vector<2x32xf32>
    %36 = arith.addf %34, %35 : vector<2x32xf32>
    %37 = math.tanh %36 : vector<2x32xf32>
    %38 = arith.mulf %33, %37 : vector<2x32xf32>
    %39 = tpu.concatenate %38, %6 in 1 : vector<2x32xf32>, vector<2x32xf32> -> vector<2x64xf32>
    %cst_17 = arith.constant dense<0.000000e+00> : vector<2x128xf32>
    %40 = tpu.matmul %39, %2, %cst_17 {dimension_numbers = #tpu.dot_dimension_numbers<[1], [0], [0], [1], [0, 0, 1, 1], [], []>} : vector<2x64xf32>, vector<64x128xf32>, vector<2x128xf32> -> vector<2x128xf32>
    %41 = vector.broadcast %3 : vector<1x128xf32> to vector<2x128xf32>
    %42 = arith.addf %40, %41 : vector<2x128xf32>
    %43 = vector.extract_strided_slice %42 {offsets = [0, 0], sizes = [2, 32], strides = [1, 1]} : vector<2x128xf32> to vector<2x32xf32>
    %44 = arith.negf %43 : vector<2x32xf32>
    %45 = math.exp %44 : vector<2x32xf32>
    %cst_18 = arith.constant 1.000000e+00 : f32
    %46 = vector.broadcast %cst_18 : f32 to vector<2x32xf32>
    %47 = arith.addf %46, %45 : vector<2x32xf32>
    %48 = arith.divf %46, %47 : vector<2x32xf32>
    %49 = vector.extract_strided_slice %42 {offsets = [0, 32], sizes = [2, 32], strides = [1, 1]} : vector<2x128xf32> to vector<2x32xf32>
    %50 = arith.negf %49 : vector<2x32xf32>
    %51 = math.exp %50 : vector<2x32xf32>
    %cst_19 = arith.constant 1.000000e+00 : f32
    %52 = vector.broadcast %cst_19 : f32 to vector<2x32xf32>
    %53 = arith.addf %52, %51 : vector<2x32xf32>
    %54 = arith.divf %52, %53 : vector<2x32xf32>
    %55 = vector.extract_strided_slice %42 {offsets = [0, 64], sizes = [2, 32], strides = [1, 1]} : vector<2x128xf32> to vector<2x32xf32>
    %56 = math.tanh %55 : vector<2x32xf32>
    %57 = vector.extract_strided_slice %42 {offsets = [0, 96], sizes = [2, 32], strides = [1, 1]} : vector<2x128xf32> to vector<2x32xf32>
    %58 = arith.negf %57 : vector<2x32xf32>
    %59 = math.exp %58 : vector<2x32xf32>
    %cst_20 = arith.constant 1.000000e+00 : f32
    %60 = vector.broadcast %cst_20 : f32 to vector<2x32xf32>
    %61 = arith.addf %60, %59 : vector<2x32xf32>
    %62 = arith.divf %60, %61 : vector<2x32xf32>
    %63 = arith.mulf %54, %7 : vector<2x32xf32>
    %64 = arith.mulf %48, %56 : vector<2x32xf32>
    %65 = arith.addf %63, %64 : vector<2x32xf32>
    %66 = math.tanh %65 : vector<2x32xf32>
    %67 = arith.mulf %62, %66 : vector<2x32xf32>
    %c1 = arith.constant 1 : index
    %c0_21 = arith.constant 0 : index
    %c0_22 = arith.constant 0 : index
    %68 = vector.load %arg0[%c1, %c0_21, %c0_22] : memref<8x2x16xf32, #tpu.memory_space<vmem>>, vector<1x2x16xf32>
    %69 = vector.shape_cast %68 : vector<1x2x16xf32> to vector<2x16xf32>
    %70 = tpu.concatenate %69, %38 in 1 : vector<2x16xf32>, vector<2x32xf32> -> vector<2x48xf32>
    %cst_23 = arith.constant dense<0.000000e+00> : vector<2x128xf32>
    %71 = tpu.matmul %70, %0, %cst_23 {dimension_numbers = #tpu.dot_dimension_numbers<[1], [0], [0], [1], [0, 0, 1, 1], [], []>} : vector<2x48xf32>, vector<48x128xf32>, vector<2x128xf32> -> vector<2x128xf32>
    %72 = vector.broadcast %1 : vector<1x128xf32> to vector<2x128xf32>
    %73 = arith.addf %71, %72 : vector<2x128xf32>
    %74 = vector.extract_strided_slice %73 {offsets = [0, 0], sizes = [2, 32], strides = [1, 1]} : vector<2x128xf32> to vector<2x32xf32>
    %75 = arith.negf %74 : vector<2x32xf32>
    %76 = math.exp %75 : vector<2x32xf32>
    %cst_24 = arith.constant 1.000000e+00 : f32
    %77 = vector.broadcast %cst_24 : f32 to vector<2x32xf32>
    %78 = arith.addf %77, %76 : vector<2x32xf32>
    %79 = arith.divf %77, %78 : vector<2x32xf32>
    %80 = vector.extract_strided_slice %73 {offsets = [0, 32], sizes = [2, 32], strides = [1, 1]} : vector<2x128xf32> to vector<2x32xf32>
    %81 = arith.negf %80 : vector<2x32xf32>
    %82 = math.exp %81 : vector<2x32xf32>
    %cst_25 = arith.constant 1.000000e+00 : f32
    %83 = vector.broadcast %cst_25 : f32 to vector<2x32xf32>
    %84 = arith.addf %83, %82 : vector<2x32xf32>
    %85 = arith.divf %83, %84 : vector<2x32xf32>
    %86 = vector.extract_strided_slice %73 {offsets = [0, 64], sizes = [2, 32], strides = [1, 1]} : vector<2x128xf32> to vector<2x32xf32>
    %87 = math.tanh %86 : vector<2x32xf32>
    %88 = vector.extract_strided_slice %73 {offsets = [0, 96], sizes = [2, 32], strides = [1, 1]} : vector<2x128xf32> to vector<2x32xf32>
    %89 = arith.negf %88 : vector<2x32xf32>
    %90 = math.exp %89 : vector<2x32xf32>
    %cst_26 = arith.constant 1.000000e+00 : f32
    %91 = vector.broadcast %cst_26 : f32 to vector<2x32xf32>
    %92 = arith.addf %91, %90 : vector<2x32xf32>
    %93 = arith.divf %91, %92 : vector<2x32xf32>
    %94 = arith.mulf %85, %36 : vector<2x32xf32>
    %95 = arith.mulf %79, %87 : vector<2x32xf32>
    %96 = arith.addf %94, %95 : vector<2x32xf32>
    %97 = math.tanh %96 : vector<2x32xf32>
    %98 = arith.mulf %93, %97 : vector<2x32xf32>
    %99 = tpu.concatenate %98, %67 in 1 : vector<2x32xf32>, vector<2x32xf32> -> vector<2x64xf32>
    %cst_27 = arith.constant dense<0.000000e+00> : vector<2x128xf32>
    %100 = tpu.matmul %99, %2, %cst_27 {dimension_numbers = #tpu.dot_dimension_numbers<[1], [0], [0], [1], [0, 0, 1, 1], [], []>} : vector<2x64xf32>, vector<64x128xf32>, vector<2x128xf32> -> vector<2x128xf32>
    %101 = vector.broadcast %3 : vector<1x128xf32> to vector<2x128xf32>
    %102 = arith.addf %100, %101 : vector<2x128xf32>
    %103 = vector.extract_strided_slice %102 {offsets = [0, 0], sizes = [2, 32], strides = [1, 1]} : vector<2x128xf32> to vector<2x32xf32>
    %104 = arith.negf %103 : vector<2x32xf32>
    %105 = math.exp %104 : vector<2x32xf32>
    %cst_28 = arith.constant 1.000000e+00 : f32
    %106 = vector.broadcast %cst_28 : f32 to vector<2x32xf32>
    %107 = arith.addf %106, %105 : vector<2x32xf32>
    %108 = arith.divf %106, %107 : vector<2x32xf32>
    %109 = vector.extract_strided_slice %102 {offsets = [0, 32], sizes = [2, 32], strides = [1, 1]} : vector<2x128xf32> to vector<2x32xf32>
    %110 = arith.negf %109 : vector<2x32xf32>
    %111 = math.exp %110 : vector<2x32xf32>
    %cst_29 = arith.constant 1.000000e+00 : f32
    %112 = vector.broadcast %cst_29 : f32 to vector<2x32xf32>
    %113 = arith.addf %112, %111 : vector<2x32xf32>
    %114 = arith.divf %112, %113 : vector<2x32xf32>
    %115 = vector.extract_strided_slice %102 {offsets = [0, 64], sizes = [2, 32], strides = [1, 1]} : vector<2x128xf32> to vector<2x32xf32>
    %116 = math.tanh %115 : vector<2x32xf32>
    %117 = vector.extract_strided_slice %102 {offsets = [0, 96], sizes = [2, 32], strides = [1, 1]} : vector<2x128xf32> to vector<2x32xf32>
    %118 = arith.negf %117 : vector<2x32xf32>
    %119 = math.exp %118 : vector<2x32xf32>
    %cst_30 = arith.constant 1.000000e+00 : f32
    %120 = vector.broadcast %cst_30 : f32 to vector<2x32xf32>
    %121 = arith.addf %120, %119 : vector<2x32xf32>
    %122 = arith.divf %120, %121 : vector<2x32xf32>
    %123 = arith.mulf %114, %65 : vector<2x32xf32>
    %124 = arith.mulf %108, %116 : vector<2x32xf32>
    %125 = arith.addf %123, %124 : vector<2x32xf32>
    %126 = math.tanh %125 : vector<2x32xf32>
    %127 = arith.mulf %122, %126 : vector<2x32xf32>
    %c2 = arith.constant 2 : index
    %c0_31 = arith.constant 0 : index
    %c0_32 = arith.constant 0 : index
    %128 = vector.load %arg0[%c2, %c0_31, %c0_32] : memref<8x2x16xf32, #tpu.memory_space<vmem>>, vector<1x2x16xf32>
    %129 = vector.shape_cast %128 : vector<1x2x16xf32> to vector<2x16xf32>
    %130 = tpu.concatenate %129, %98 in 1 : vector<2x16xf32>, vector<2x32xf32> -> vector<2x48xf32>
    %cst_33 = arith.constant dense<0.000000e+00> : vector<2x128xf32>
    %131 = tpu.matmul %130, %0, %cst_33 {dimension_numbers = #tpu.dot_dimension_numbers<[1], [0], [0], [1], [0, 0, 1, 1], [], []>} : vector<2x48xf32>, vector<48x128xf32>, vector<2x128xf32> -> vector<2x128xf32>
    %132 = vector.broadcast %1 : vector<1x128xf32> to vector<2x128xf32>
    %133 = arith.addf %131, %132 : vector<2x128xf32>
    %134 = vector.extract_strided_slice %133 {offsets = [0, 0], sizes = [2, 32], strides = [1, 1]} : vector<2x128xf32> to vector<2x32xf32>
    %135 = arith.negf %134 : vector<2x32xf32>
    %136 = math.exp %135 : vector<2x32xf32>
    %cst_34 = arith.constant 1.000000e+00 : f32
    %137 = vector.broadcast %cst_34 : f32 to vector<2x32xf32>
    %138 = arith.addf %137, %136 : vector<2x32xf32>
    %139 = arith.divf %137, %138 : vector<2x32xf32>
    %140 = vector.extract_strided_slice %133 {offsets = [0, 32], sizes = [2, 32], strides = [1, 1]} : vector<2x128xf32> to vector<2x32xf32>
    %141 = arith.negf %140 : vector<2x32xf32>
    %142 = math.exp %141 : vector<2x32xf32>
    %cst_35 = arith.constant 1.000000e+00 : f32
    %143 = vector.broadcast %cst_35 : f32 to vector<2x32xf32>
    %144 = arith.addf %143, %142 : vector<2x32xf32>
    %145 = arith.divf %143, %144 : vector<2x32xf32>
    %146 = vector.extract_strided_slice %133 {offsets = [0, 64], sizes = [2, 32], strides = [1, 1]} : vector<2x128xf32> to vector<2x32xf32>
    %147 = math.tanh %146 : vector<2x32xf32>
    %148 = vector.extract_strided_slice %133 {offsets = [0, 96], sizes = [2, 32], strides = [1, 1]} : vector<2x128xf32> to vector<2x32xf32>
    %149 = arith.negf %148 : vector<2x32xf32>
    %150 = math.exp %149 : vector<2x32xf32>
    %cst_36 = arith.constant 1.000000e+00 : f32
    %151 = vector.broadcast %cst_36 : f32 to vector<2x32xf32>
    %152 = arith.addf %151, %150 : vector<2x32xf32>
    %153 = arith.divf %151, %152 : vector<2x32xf32>
    %154 = arith.mulf %145, %96 : vector<2x32xf32>
    %155 = arith.mulf %139, %147 : vector<2x32xf32>
    %156 = arith.addf %154, %155 : vector<2x32xf32>
    %157 = math.tanh %156 : vector<2x32xf32>
    %158 = arith.mulf %153, %157 : vector<2x32xf32>
    %159 = tpu.concatenate %158, %127 in 1 : vector<2x32xf32>, vector<2x32xf32> -> vector<2x64xf32>
    %cst_37 = arith.constant dense<0.000000e+00> : vector<2x128xf32>
    %160 = tpu.matmul %159, %2, %cst_37 {dimension_numbers = #tpu.dot_dimension_numbers<[1], [0], [0], [1], [0, 0, 1, 1], [], []>} : vector<2x64xf32>, vector<64x128xf32>, vector<2x128xf32> -> vector<2x128xf32>
    %161 = vector.broadcast %3 : vector<1x128xf32> to vector<2x128xf32>
    %162 = arith.addf %160, %161 : vector<2x128xf32>
    %163 = vector.extract_strided_slice %162 {offsets = [0, 0], sizes = [2, 32], strides = [1, 1]} : vector<2x128xf32> to vector<2x32xf32>
    %164 = arith.negf %163 : vector<2x32xf32>
    %165 = math.exp %164 : vector<2x32xf32>
    %cst_38 = arith.constant 1.000000e+00 : f32
    %166 = vector.broadcast %cst_38 : f32 to vector<2x32xf32>
    %167 = arith.addf %166, %165 : vector<2x32xf32>
    %168 = arith.divf %166, %167 : vector<2x32xf32>
    %169 = vector.extract_strided_slice %162 {offsets = [0, 32], sizes = [2, 32], strides = [1, 1]} : vector<2x128xf32> to vector<2x32xf32>
    %170 = arith.negf %169 : vector<2x32xf32>
    %171 = math.exp %170 : vector<2x32xf32>
    %cst_39 = arith.constant 1.000000e+00 : f32
    %172 = vector.broadcast %cst_39 : f32 to vector<2x32xf32>
    %173 = arith.addf %172, %171 : vector<2x32xf32>
    %174 = arith.divf %172, %173 : vector<2x32xf32>
    %175 = vector.extract_strided_slice %162 {offsets = [0, 64], sizes = [2, 32], strides = [1, 1]} : vector<2x128xf32> to vector<2x32xf32>
    %176 = math.tanh %175 : vector<2x32xf32>
    %177 = vector.extract_strided_slice %162 {offsets = [0, 96], sizes = [2, 32], strides = [1, 1]} : vector<2x128xf32> to vector<2x32xf32>
    %178 = arith.negf %177 : vector<2x32xf32>
    %179 = math.exp %178 : vector<2x32xf32>
    %cst_40 = arith.constant 1.000000e+00 : f32
    %180 = vector.broadcast %cst_40 : f32 to vector<2x32xf32>
    %181 = arith.addf %180, %179 : vector<2x32xf32>
    %182 = arith.divf %180, %181 : vector<2x32xf32>
    %183 = arith.mulf %174, %125 : vector<2x32xf32>
    %184 = arith.mulf %168, %176 : vector<2x32xf32>
    %185 = arith.addf %183, %184 : vector<2x32xf32>
    %186 = math.tanh %185 : vector<2x32xf32>
    %187 = arith.mulf %182, %186 : vector<2x32xf32>
    %c3 = arith.constant 3 : index
    %c0_41 = arith.constant 0 : index
    %c0_42 = arith.constant 0 : index
    %188 = vector.load %arg0[%c3, %c0_41, %c0_42] : memref<8x2x16xf32, #tpu.memory_space<vmem>>, vector<1x2x16xf32>
    %189 = vector.shape_cast %188 : vector<1x2x16xf32> to vector<2x16xf32>
    %190 = tpu.concatenate %189, %158 in 1 : vector<2x16xf32>, vector<2x32xf32> -> vector<2x48xf32>
    %cst_43 = arith.constant dense<0.000000e+00> : vector<2x128xf32>
    %191 = tpu.matmul %190, %0, %cst_43 {dimension_numbers = #tpu.dot_dimension_numbers<[1], [0], [0], [1], [0, 0, 1, 1], [], []>} : vector<2x48xf32>, vector<48x128xf32>, vector<2x128xf32> -> vector<2x128xf32>
    %192 = vector.broadcast %1 : vector<1x128xf32> to vector<2x128xf32>
    %193 = arith.addf %191, %192 : vector<2x128xf32>
    %194 = vector.extract_strided_slice %193 {offsets = [0, 0], sizes = [2, 32], strides = [1, 1]} : vector<2x128xf32> to vector<2x32xf32>
    %195 = arith.negf %194 : vector<2x32xf32>
    %196 = math.exp %195 : vector<2x32xf32>
    %cst_44 = arith.constant 1.000000e+00 : f32
    %197 = vector.broadcast %cst_44 : f32 to vector<2x32xf32>
    %198 = arith.addf %197, %196 : vector<2x32xf32>
    %199 = arith.divf %197, %198 : vector<2x32xf32>
    %200 = vector.extract_strided_slice %193 {offsets = [0, 32], sizes = [2, 32], strides = [1, 1]} : vector<2x128xf32> to vector<2x32xf32>
    %201 = arith.negf %200 : vector<2x32xf32>
    %202 = math.exp %201 : vector<2x32xf32>
    %cst_45 = arith.constant 1.000000e+00 : f32
    %203 = vector.broadcast %cst_45 : f32 to vector<2x32xf32>
    %204 = arith.addf %203, %202 : vector<2x32xf32>
    %205 = arith.divf %203, %204 : vector<2x32xf32>
    %206 = vector.extract_strided_slice %193 {offsets = [0, 64], sizes = [2, 32], strides = [1, 1]} : vector<2x128xf32> to vector<2x32xf32>
    %207 = math.tanh %206 : vector<2x32xf32>
    %208 = vector.extract_strided_slice %193 {offsets = [0, 96], sizes = [2, 32], strides = [1, 1]} : vector<2x128xf32> to vector<2x32xf32>
    %209 = arith.negf %208 : vector<2x32xf32>
    %210 = math.exp %209 : vector<2x32xf32>
    %cst_46 = arith.constant 1.000000e+00 : f32
    %211 = vector.broadcast %cst_46 : f32 to vector<2x32xf32>
    %212 = arith.addf %211, %210 : vector<2x32xf32>
    %213 = arith.divf %211, %212 : vector<2x32xf32>
    %214 = arith.mulf %205, %156 : vector<2x32xf32>
    %215 = arith.mulf %199, %207 : vector<2x32xf32>
    %216 = arith.addf %214, %215 : vector<2x32xf32>
    %217 = math.tanh %216 : vector<2x32xf32>
    %218 = arith.mulf %213, %217 : vector<2x32xf32>
    %219 = tpu.concatenate %218, %187 in 1 : vector<2x32xf32>, vector<2x32xf32> -> vector<2x64xf32>
    %cst_47 = arith.constant dense<0.000000e+00> : vector<2x128xf32>
    %220 = tpu.matmul %219, %2, %cst_47 {dimension_numbers = #tpu.dot_dimension_numbers<[1], [0], [0], [1], [0, 0, 1, 1], [], []>} : vector<2x64xf32>, vector<64x128xf32>, vector<2x128xf32> -> vector<2x128xf32>
    %221 = vector.broadcast %3 : vector<1x128xf32> to vector<2x128xf32>
    %222 = arith.addf %220, %221 : vector<2x128xf32>
    %223 = vector.extract_strided_slice %222 {offsets = [0, 0], sizes = [2, 32], strides = [1, 1]} : vector<2x128xf32> to vector<2x32xf32>
    %224 = arith.negf %223 : vector<2x32xf32>
    %225 = math.exp %224 : vector<2x32xf32>
    %cst_48 = arith.constant 1.000000e+00 : f32
    %226 = vector.broadcast %cst_48 : f32 to vector<2x32xf32>
    %227 = arith.addf %226, %225 : vector<2x32xf32>
    %228 = arith.divf %226, %227 : vector<2x32xf32>
    %229 = vector.extract_strided_slice %222 {offsets = [0, 32], sizes = [2, 32], strides = [1, 1]} : vector<2x128xf32> to vector<2x32xf32>
    %230 = arith.negf %229 : vector<2x32xf32>
    %231 = math.exp %230 : vector<2x32xf32>
    %cst_49 = arith.constant 1.000000e+00 : f32
    %232 = vector.broadcast %cst_49 : f32 to vector<2x32xf32>
    %233 = arith.addf %232, %231 : vector<2x32xf32>
    %234 = arith.divf %232, %233 : vector<2x32xf32>
    %235 = vector.extract_strided_slice %222 {offsets = [0, 64], sizes = [2, 32], strides = [1, 1]} : vector<2x128xf32> to vector<2x32xf32>
    %236 = math.tanh %235 : vector<2x32xf32>
    %237 = vector.extract_strided_slice %222 {offsets = [0, 96], sizes = [2, 32], strides = [1, 1]} : vector<2x128xf32> to vector<2x32xf32>
    %238 = arith.negf %237 : vector<2x32xf32>
    %239 = math.exp %238 : vector<2x32xf32>
    %cst_50 = arith.constant 1.000000e+00 : f32
    %240 = vector.broadcast %cst_50 : f32 to vector<2x32xf32>
    %241 = arith.addf %240, %239 : vector<2x32xf32>
    %242 = arith.divf %240, %241 : vector<2x32xf32>
    %243 = arith.mulf %234, %185 : vector<2x32xf32>
    %244 = arith.mulf %228, %236 : vector<2x32xf32>
    %245 = arith.addf %243, %244 : vector<2x32xf32>
    %246 = math.tanh %245 : vector<2x32xf32>
    %247 = arith.mulf %242, %246 : vector<2x32xf32>
    %c4 = arith.constant 4 : index
    %c0_51 = arith.constant 0 : index
    %c0_52 = arith.constant 0 : index
    %248 = vector.load %arg0[%c4, %c0_51, %c0_52] : memref<8x2x16xf32, #tpu.memory_space<vmem>>, vector<1x2x16xf32>
    %249 = vector.shape_cast %248 : vector<1x2x16xf32> to vector<2x16xf32>
    %250 = tpu.concatenate %249, %218 in 1 : vector<2x16xf32>, vector<2x32xf32> -> vector<2x48xf32>
    %cst_53 = arith.constant dense<0.000000e+00> : vector<2x128xf32>
    %251 = tpu.matmul %250, %0, %cst_53 {dimension_numbers = #tpu.dot_dimension_numbers<[1], [0], [0], [1], [0, 0, 1, 1], [], []>} : vector<2x48xf32>, vector<48x128xf32>, vector<2x128xf32> -> vector<2x128xf32>
    %252 = vector.broadcast %1 : vector<1x128xf32> to vector<2x128xf32>
    %253 = arith.addf %251, %252 : vector<2x128xf32>
    %254 = vector.extract_strided_slice %253 {offsets = [0, 0], sizes = [2, 32], strides = [1, 1]} : vector<2x128xf32> to vector<2x32xf32>
    %255 = arith.negf %254 : vector<2x32xf32>
    %256 = math.exp %255 : vector<2x32xf32>
    %cst_54 = arith.constant 1.000000e+00 : f32
    %257 = vector.broadcast %cst_54 : f32 to vector<2x32xf32>
    %258 = arith.addf %257, %256 : vector<2x32xf32>
    %259 = arith.divf %257, %258 : vector<2x32xf32>
    %260 = vector.extract_strided_slice %253 {offsets = [0, 32], sizes = [2, 32], strides = [1, 1]} : vector<2x128xf32> to vector<2x32xf32>
    %261 = arith.negf %260 : vector<2x32xf32>
    %262 = math.exp %261 : vector<2x32xf32>
    %cst_55 = arith.constant 1.000000e+00 : f32
    %263 = vector.broadcast %cst_55 : f32 to vector<2x32xf32>
    %264 = arith.addf %263, %262 : vector<2x32xf32>
    %265 = arith.divf %263, %264 : vector<2x32xf32>
    %266 = vector.extract_strided_slice %253 {offsets = [0, 64], sizes = [2, 32], strides = [1, 1]} : vector<2x128xf32> to vector<2x32xf32>
    %267 = math.tanh %266 : vector<2x32xf32>
    %268 = vector.extract_strided_slice %253 {offsets = [0, 96], sizes = [2, 32], strides = [1, 1]} : vector<2x128xf32> to vector<2x32xf32>
    %269 = arith.negf %268 : vector<2x32xf32>
    %270 = math.exp %269 : vector<2x32xf32>
    %cst_56 = arith.constant 1.000000e+00 : f32
    %271 = vector.broadcast %cst_56 : f32 to vector<2x32xf32>
    %272 = arith.addf %271, %270 : vector<2x32xf32>
    %273 = arith.divf %271, %272 : vector<2x32xf32>
    %274 = arith.mulf %265, %216 : vector<2x32xf32>
    %275 = arith.mulf %259, %267 : vector<2x32xf32>
    %276 = arith.addf %274, %275 : vector<2x32xf32>
    %277 = math.tanh %276 : vector<2x32xf32>
    %278 = arith.mulf %273, %277 : vector<2x32xf32>
    %279 = tpu.concatenate %278, %247 in 1 : vector<2x32xf32>, vector<2x32xf32> -> vector<2x64xf32>
    %cst_57 = arith.constant dense<0.000000e+00> : vector<2x128xf32>
    %280 = tpu.matmul %279, %2, %cst_57 {dimension_numbers = #tpu.dot_dimension_numbers<[1], [0], [0], [1], [0, 0, 1, 1], [], []>} : vector<2x64xf32>, vector<64x128xf32>, vector<2x128xf32> -> vector<2x128xf32>
    %281 = vector.broadcast %3 : vector<1x128xf32> to vector<2x128xf32>
    %282 = arith.addf %280, %281 : vector<2x128xf32>
    %283 = vector.extract_strided_slice %282 {offsets = [0, 0], sizes = [2, 32], strides = [1, 1]} : vector<2x128xf32> to vector<2x32xf32>
    %284 = arith.negf %283 : vector<2x32xf32>
    %285 = math.exp %284 : vector<2x32xf32>
    %cst_58 = arith.constant 1.000000e+00 : f32
    %286 = vector.broadcast %cst_58 : f32 to vector<2x32xf32>
    %287 = arith.addf %286, %285 : vector<2x32xf32>
    %288 = arith.divf %286, %287 : vector<2x32xf32>
    %289 = vector.extract_strided_slice %282 {offsets = [0, 32], sizes = [2, 32], strides = [1, 1]} : vector<2x128xf32> to vector<2x32xf32>
    %290 = arith.negf %289 : vector<2x32xf32>
    %291 = math.exp %290 : vector<2x32xf32>
    %cst_59 = arith.constant 1.000000e+00 : f32
    %292 = vector.broadcast %cst_59 : f32 to vector<2x32xf32>
    %293 = arith.addf %292, %291 : vector<2x32xf32>
    %294 = arith.divf %292, %293 : vector<2x32xf32>
    %295 = vector.extract_strided_slice %282 {offsets = [0, 64], sizes = [2, 32], strides = [1, 1]} : vector<2x128xf32> to vector<2x32xf32>
    %296 = math.tanh %295 : vector<2x32xf32>
    %297 = vector.extract_strided_slice %282 {offsets = [0, 96], sizes = [2, 32], strides = [1, 1]} : vector<2x128xf32> to vector<2x32xf32>
    %298 = arith.negf %297 : vector<2x32xf32>
    %299 = math.exp %298 : vector<2x32xf32>
    %cst_60 = arith.constant 1.000000e+00 : f32
    %300 = vector.broadcast %cst_60 : f32 to vector<2x32xf32>
    %301 = arith.addf %300, %299 : vector<2x32xf32>
    %302 = arith.divf %300, %301 : vector<2x32xf32>
    %303 = arith.mulf %294, %245 : vector<2x32xf32>
    %304 = arith.mulf %288, %296 : vector<2x32xf32>
    %305 = arith.addf %303, %304 : vector<2x32xf32>
    %306 = math.tanh %305 : vector<2x32xf32>
    %307 = arith.mulf %302, %306 : vector<2x32xf32>
    %c5 = arith.constant 5 : index
    %c0_61 = arith.constant 0 : index
    %c0_62 = arith.constant 0 : index
    %308 = vector.load %arg0[%c5, %c0_61, %c0_62] : memref<8x2x16xf32, #tpu.memory_space<vmem>>, vector<1x2x16xf32>
    %309 = vector.shape_cast %308 : vector<1x2x16xf32> to vector<2x16xf32>
    %310 = tpu.concatenate %309, %278 in 1 : vector<2x16xf32>, vector<2x32xf32> -> vector<2x48xf32>
    %cst_63 = arith.constant dense<0.000000e+00> : vector<2x128xf32>
    %311 = tpu.matmul %310, %0, %cst_63 {dimension_numbers = #tpu.dot_dimension_numbers<[1], [0], [0], [1], [0, 0, 1, 1], [], []>} : vector<2x48xf32>, vector<48x128xf32>, vector<2x128xf32> -> vector<2x128xf32>
    %312 = vector.broadcast %1 : vector<1x128xf32> to vector<2x128xf32>
    %313 = arith.addf %311, %312 : vector<2x128xf32>
    %314 = vector.extract_strided_slice %313 {offsets = [0, 0], sizes = [2, 32], strides = [1, 1]} : vector<2x128xf32> to vector<2x32xf32>
    %315 = arith.negf %314 : vector<2x32xf32>
    %316 = math.exp %315 : vector<2x32xf32>
    %cst_64 = arith.constant 1.000000e+00 : f32
    %317 = vector.broadcast %cst_64 : f32 to vector<2x32xf32>
    %318 = arith.addf %317, %316 : vector<2x32xf32>
    %319 = arith.divf %317, %318 : vector<2x32xf32>
    %320 = vector.extract_strided_slice %313 {offsets = [0, 32], sizes = [2, 32], strides = [1, 1]} : vector<2x128xf32> to vector<2x32xf32>
    %321 = arith.negf %320 : vector<2x32xf32>
    %322 = math.exp %321 : vector<2x32xf32>
    %cst_65 = arith.constant 1.000000e+00 : f32
    %323 = vector.broadcast %cst_65 : f32 to vector<2x32xf32>
    %324 = arith.addf %323, %322 : vector<2x32xf32>
    %325 = arith.divf %323, %324 : vector<2x32xf32>
    %326 = vector.extract_strided_slice %313 {offsets = [0, 64], sizes = [2, 32], strides = [1, 1]} : vector<2x128xf32> to vector<2x32xf32>
    %327 = math.tanh %326 : vector<2x32xf32>
    %328 = vector.extract_strided_slice %313 {offsets = [0, 96], sizes = [2, 32], strides = [1, 1]} : vector<2x128xf32> to vector<2x32xf32>
    %329 = arith.negf %328 : vector<2x32xf32>
    %330 = math.exp %329 : vector<2x32xf32>
    %cst_66 = arith.constant 1.000000e+00 : f32
    %331 = vector.broadcast %cst_66 : f32 to vector<2x32xf32>
    %332 = arith.addf %331, %330 : vector<2x32xf32>
    %333 = arith.divf %331, %332 : vector<2x32xf32>
    %334 = arith.mulf %325, %276 : vector<2x32xf32>
    %335 = arith.mulf %319, %327 : vector<2x32xf32>
    %336 = arith.addf %334, %335 : vector<2x32xf32>
    %337 = math.tanh %336 : vector<2x32xf32>
    %338 = arith.mulf %333, %337 : vector<2x32xf32>
    %339 = tpu.concatenate %338, %307 in 1 : vector<2x32xf32>, vector<2x32xf32> -> vector<2x64xf32>
    %cst_67 = arith.constant dense<0.000000e+00> : vector<2x128xf32>
    %340 = tpu.matmul %339, %2, %cst_67 {dimension_numbers = #tpu.dot_dimension_numbers<[1], [0], [0], [1], [0, 0, 1, 1], [], []>} : vector<2x64xf32>, vector<64x128xf32>, vector<2x128xf32> -> vector<2x128xf32>
    %341 = vector.broadcast %3 : vector<1x128xf32> to vector<2x128xf32>
    %342 = arith.addf %340, %341 : vector<2x128xf32>
    %343 = vector.extract_strided_slice %342 {offsets = [0, 0], sizes = [2, 32], strides = [1, 1]} : vector<2x128xf32> to vector<2x32xf32>
    %344 = arith.negf %343 : vector<2x32xf32>
    %345 = math.exp %344 : vector<2x32xf32>
    %cst_68 = arith.constant 1.000000e+00 : f32
    %346 = vector.broadcast %cst_68 : f32 to vector<2x32xf32>
    %347 = arith.addf %346, %345 : vector<2x32xf32>
    %348 = arith.divf %346, %347 : vector<2x32xf32>
    %349 = vector.extract_strided_slice %342 {offsets = [0, 32], sizes = [2, 32], strides = [1, 1]} : vector<2x128xf32> to vector<2x32xf32>
    %350 = arith.negf %349 : vector<2x32xf32>
    %351 = math.exp %350 : vector<2x32xf32>
    %cst_69 = arith.constant 1.000000e+00 : f32
    %352 = vector.broadcast %cst_69 : f32 to vector<2x32xf32>
    %353 = arith.addf %352, %351 : vector<2x32xf32>
    %354 = arith.divf %352, %353 : vector<2x32xf32>
    %355 = vector.extract_strided_slice %342 {offsets = [0, 64], sizes = [2, 32], strides = [1, 1]} : vector<2x128xf32> to vector<2x32xf32>
    %356 = math.tanh %355 : vector<2x32xf32>
    %357 = vector.extract_strided_slice %342 {offsets = [0, 96], sizes = [2, 32], strides = [1, 1]} : vector<2x128xf32> to vector<2x32xf32>
    %358 = arith.negf %357 : vector<2x32xf32>
    %359 = math.exp %358 : vector<2x32xf32>
    %cst_70 = arith.constant 1.000000e+00 : f32
    %360 = vector.broadcast %cst_70 : f32 to vector<2x32xf32>
    %361 = arith.addf %360, %359 : vector<2x32xf32>
    %362 = arith.divf %360, %361 : vector<2x32xf32>
    %363 = arith.mulf %354, %305 : vector<2x32xf32>
    %364 = arith.mulf %348, %356 : vector<2x32xf32>
    %365 = arith.addf %363, %364 : vector<2x32xf32>
    %366 = math.tanh %365 : vector<2x32xf32>
    %367 = arith.mulf %362, %366 : vector<2x32xf32>
    %c6 = arith.constant 6 : index
    %c0_71 = arith.constant 0 : index
    %c0_72 = arith.constant 0 : index
    %368 = vector.load %arg0[%c6, %c0_71, %c0_72] : memref<8x2x16xf32, #tpu.memory_space<vmem>>, vector<1x2x16xf32>
    %369 = vector.shape_cast %368 : vector<1x2x16xf32> to vector<2x16xf32>
    %370 = tpu.concatenate %369, %338 in 1 : vector<2x16xf32>, vector<2x32xf32> -> vector<2x48xf32>
    %cst_73 = arith.constant dense<0.000000e+00> : vector<2x128xf32>
    %371 = tpu.matmul %370, %0, %cst_73 {dimension_numbers = #tpu.dot_dimension_numbers<[1], [0], [0], [1], [0, 0, 1, 1], [], []>} : vector<2x48xf32>, vector<48x128xf32>, vector<2x128xf32> -> vector<2x128xf32>
    %372 = vector.broadcast %1 : vector<1x128xf32> to vector<2x128xf32>
    %373 = arith.addf %371, %372 : vector<2x128xf32>
    %374 = vector.extract_strided_slice %373 {offsets = [0, 0], sizes = [2, 32], strides = [1, 1]} : vector<2x128xf32> to vector<2x32xf32>
    %375 = arith.negf %374 : vector<2x32xf32>
    %376 = math.exp %375 : vector<2x32xf32>
    %cst_74 = arith.constant 1.000000e+00 : f32
    %377 = vector.broadcast %cst_74 : f32 to vector<2x32xf32>
    %378 = arith.addf %377, %376 : vector<2x32xf32>
    %379 = arith.divf %377, %378 : vector<2x32xf32>
    %380 = vector.extract_strided_slice %373 {offsets = [0, 32], sizes = [2, 32], strides = [1, 1]} : vector<2x128xf32> to vector<2x32xf32>
    %381 = arith.negf %380 : vector<2x32xf32>
    %382 = math.exp %381 : vector<2x32xf32>
    %cst_75 = arith.constant 1.000000e+00 : f32
    %383 = vector.broadcast %cst_75 : f32 to vector<2x32xf32>
    %384 = arith.addf %383, %382 : vector<2x32xf32>
    %385 = arith.divf %383, %384 : vector<2x32xf32>
    %386 = vector.extract_strided_slice %373 {offsets = [0, 64], sizes = [2, 32], strides = [1, 1]} : vector<2x128xf32> to vector<2x32xf32>
    %387 = math.tanh %386 : vector<2x32xf32>
    %388 = vector.extract_strided_slice %373 {offsets = [0, 96], sizes = [2, 32], strides = [1, 1]} : vector<2x128xf32> to vector<2x32xf32>
    %389 = arith.negf %388 : vector<2x32xf32>
    %390 = math.exp %389 : vector<2x32xf32>
    %cst_76 = arith.constant 1.000000e+00 : f32
    %391 = vector.broadcast %cst_76 : f32 to vector<2x32xf32>
    %392 = arith.addf %391, %390 : vector<2x32xf32>
    %393 = arith.divf %391, %392 : vector<2x32xf32>
    %394 = arith.mulf %385, %336 : vector<2x32xf32>
    %395 = arith.mulf %379, %387 : vector<2x32xf32>
    %396 = arith.addf %394, %395 : vector<2x32xf32>
    %397 = math.tanh %396 : vector<2x32xf32>
    %398 = arith.mulf %393, %397 : vector<2x32xf32>
    %399 = tpu.concatenate %398, %367 in 1 : vector<2x32xf32>, vector<2x32xf32> -> vector<2x64xf32>
    %cst_77 = arith.constant dense<0.000000e+00> : vector<2x128xf32>
    %400 = tpu.matmul %399, %2, %cst_77 {dimension_numbers = #tpu.dot_dimension_numbers<[1], [0], [0], [1], [0, 0, 1, 1], [], []>} : vector<2x64xf32>, vector<64x128xf32>, vector<2x128xf32> -> vector<2x128xf32>
    %401 = vector.broadcast %3 : vector<1x128xf32> to vector<2x128xf32>
    %402 = arith.addf %400, %401 : vector<2x128xf32>
    %403 = vector.extract_strided_slice %402 {offsets = [0, 0], sizes = [2, 32], strides = [1, 1]} : vector<2x128xf32> to vector<2x32xf32>
    %404 = arith.negf %403 : vector<2x32xf32>
    %405 = math.exp %404 : vector<2x32xf32>
    %cst_78 = arith.constant 1.000000e+00 : f32
    %406 = vector.broadcast %cst_78 : f32 to vector<2x32xf32>
    %407 = arith.addf %406, %405 : vector<2x32xf32>
    %408 = arith.divf %406, %407 : vector<2x32xf32>
    %409 = vector.extract_strided_slice %402 {offsets = [0, 32], sizes = [2, 32], strides = [1, 1]} : vector<2x128xf32> to vector<2x32xf32>
    %410 = arith.negf %409 : vector<2x32xf32>
    %411 = math.exp %410 : vector<2x32xf32>
    %cst_79 = arith.constant 1.000000e+00 : f32
    %412 = vector.broadcast %cst_79 : f32 to vector<2x32xf32>
    %413 = arith.addf %412, %411 : vector<2x32xf32>
    %414 = arith.divf %412, %413 : vector<2x32xf32>
    %415 = vector.extract_strided_slice %402 {offsets = [0, 64], sizes = [2, 32], strides = [1, 1]} : vector<2x128xf32> to vector<2x32xf32>
    %416 = math.tanh %415 : vector<2x32xf32>
    %417 = vector.extract_strided_slice %402 {offsets = [0, 96], sizes = [2, 32], strides = [1, 1]} : vector<2x128xf32> to vector<2x32xf32>
    %418 = arith.negf %417 : vector<2x32xf32>
    %419 = math.exp %418 : vector<2x32xf32>
    %cst_80 = arith.constant 1.000000e+00 : f32
    %420 = vector.broadcast %cst_80 : f32 to vector<2x32xf32>
    %421 = arith.addf %420, %419 : vector<2x32xf32>
    %422 = arith.divf %420, %421 : vector<2x32xf32>
    %423 = arith.mulf %414, %365 : vector<2x32xf32>
    %424 = arith.mulf %408, %416 : vector<2x32xf32>
    %425 = arith.addf %423, %424 : vector<2x32xf32>
    %426 = math.tanh %425 : vector<2x32xf32>
    %427 = arith.mulf %422, %426 : vector<2x32xf32>
    %c7 = arith.constant 7 : index
    %c0_81 = arith.constant 0 : index
    %c0_82 = arith.constant 0 : index
    %428 = vector.load %arg0[%c7, %c0_81, %c0_82] : memref<8x2x16xf32, #tpu.memory_space<vmem>>, vector<1x2x16xf32>
    %429 = vector.shape_cast %428 : vector<1x2x16xf32> to vector<2x16xf32>
    %430 = tpu.concatenate %429, %398 in 1 : vector<2x16xf32>, vector<2x32xf32> -> vector<2x48xf32>
    %cst_83 = arith.constant dense<0.000000e+00> : vector<2x128xf32>
    %431 = tpu.matmul %430, %0, %cst_83 {dimension_numbers = #tpu.dot_dimension_numbers<[1], [0], [0], [1], [0, 0, 1, 1], [], []>} : vector<2x48xf32>, vector<48x128xf32>, vector<2x128xf32> -> vector<2x128xf32>
    %432 = vector.broadcast %1 : vector<1x128xf32> to vector<2x128xf32>
    %433 = arith.addf %431, %432 : vector<2x128xf32>
    %434 = vector.extract_strided_slice %433 {offsets = [0, 0], sizes = [2, 32], strides = [1, 1]} : vector<2x128xf32> to vector<2x32xf32>
    %435 = arith.negf %434 : vector<2x32xf32>
    %436 = math.exp %435 : vector<2x32xf32>
    %cst_84 = arith.constant 1.000000e+00 : f32
    %437 = vector.broadcast %cst_84 : f32 to vector<2x32xf32>
    %438 = arith.addf %437, %436 : vector<2x32xf32>
    %439 = arith.divf %437, %438 : vector<2x32xf32>
    %440 = vector.extract_strided_slice %433 {offsets = [0, 32], sizes = [2, 32], strides = [1, 1]} : vector<2x128xf32> to vector<2x32xf32>
    %441 = arith.negf %440 : vector<2x32xf32>
    %442 = math.exp %441 : vector<2x32xf32>
    %cst_85 = arith.constant 1.000000e+00 : f32
    %443 = vector.broadcast %cst_85 : f32 to vector<2x32xf32>
    %444 = arith.addf %443, %442 : vector<2x32xf32>
    %445 = arith.divf %443, %444 : vector<2x32xf32>
    %446 = vector.extract_strided_slice %433 {offsets = [0, 64], sizes = [2, 32], strides = [1, 1]} : vector<2x128xf32> to vector<2x32xf32>
    %447 = math.tanh %446 : vector<2x32xf32>
    %448 = vector.extract_strided_slice %433 {offsets = [0, 96], sizes = [2, 32], strides = [1, 1]} : vector<2x128xf32> to vector<2x32xf32>
    %449 = arith.negf %448 : vector<2x32xf32>
    %450 = math.exp %449 : vector<2x32xf32>
    %cst_86 = arith.constant 1.000000e+00 : f32
    %451 = vector.broadcast %cst_86 : f32 to vector<2x32xf32>
    %452 = arith.addf %451, %450 : vector<2x32xf32>
    %453 = arith.divf %451, %452 : vector<2x32xf32>
    %454 = arith.mulf %445, %396 : vector<2x32xf32>
    %455 = arith.mulf %439, %447 : vector<2x32xf32>
    %456 = arith.addf %454, %455 : vector<2x32xf32>
    %457 = math.tanh %456 : vector<2x32xf32>
    %458 = arith.mulf %453, %457 : vector<2x32xf32>
    %459 = tpu.concatenate %458, %427 in 1 : vector<2x32xf32>, vector<2x32xf32> -> vector<2x64xf32>
    %cst_87 = arith.constant dense<0.000000e+00> : vector<2x128xf32>
    %460 = tpu.matmul %459, %2, %cst_87 {dimension_numbers = #tpu.dot_dimension_numbers<[1], [0], [0], [1], [0, 0, 1, 1], [], []>} : vector<2x64xf32>, vector<64x128xf32>, vector<2x128xf32> -> vector<2x128xf32>
    %461 = vector.broadcast %3 : vector<1x128xf32> to vector<2x128xf32>
    %462 = arith.addf %460, %461 : vector<2x128xf32>
    %463 = vector.extract_strided_slice %462 {offsets = [0, 0], sizes = [2, 32], strides = [1, 1]} : vector<2x128xf32> to vector<2x32xf32>
    %464 = arith.negf %463 : vector<2x32xf32>
    %465 = math.exp %464 : vector<2x32xf32>
    %cst_88 = arith.constant 1.000000e+00 : f32
    %466 = vector.broadcast %cst_88 : f32 to vector<2x32xf32>
    %467 = arith.addf %466, %465 : vector<2x32xf32>
    %468 = arith.divf %466, %467 : vector<2x32xf32>
    %469 = vector.extract_strided_slice %462 {offsets = [0, 32], sizes = [2, 32], strides = [1, 1]} : vector<2x128xf32> to vector<2x32xf32>
    %470 = arith.negf %469 : vector<2x32xf32>
    %471 = math.exp %470 : vector<2x32xf32>
    %cst_89 = arith.constant 1.000000e+00 : f32
    %472 = vector.broadcast %cst_89 : f32 to vector<2x32xf32>
    %473 = arith.addf %472, %471 : vector<2x32xf32>
    %474 = arith.divf %472, %473 : vector<2x32xf32>
    %475 = vector.extract_strided_slice %462 {offsets = [0, 64], sizes = [2, 32], strides = [1, 1]} : vector<2x128xf32> to vector<2x32xf32>
    %476 = math.tanh %475 : vector<2x32xf32>
    %477 = vector.extract_strided_slice %462 {offsets = [0, 96], sizes = [2, 32], strides = [1, 1]} : vector<2x128xf32> to vector<2x32xf32>
    %478 = arith.negf %477 : vector<2x32xf32>
    %479 = math.exp %478 : vector<2x32xf32>
    %cst_90 = arith.constant 1.000000e+00 : f32
    %480 = vector.broadcast %cst_90 : f32 to vector<2x32xf32>
    %481 = arith.addf %480, %479 : vector<2x32xf32>
    %482 = arith.divf %480, %481 : vector<2x32xf32>
    %483 = arith.mulf %474, %425 : vector<2x32xf32>
    %484 = arith.mulf %468, %476 : vector<2x32xf32>
    %485 = arith.addf %483, %484 : vector<2x32xf32>
    %486 = math.tanh %485 : vector<2x32xf32>
    %487 = arith.mulf %482, %486 : vector<2x32xf32>
    %488 = tpu.concatenate %67, %127, %187, %247, %307, %367, %427, %487 in 0 : vector<2x32xf32>, vector<2x32xf32>, vector<2x32xf32>, vector<2x32xf32>, vector<2x32xf32>, vector<2x32xf32>, vector<2x32xf32>, vector<2x32xf32> -> vector<16x32xf32>
    %c0_91 = arith.constant 0 : index
    %c0_92 = arith.constant 0 : index
    %489 = vector.load %arg5[%c0_91, %c0_92] : memref<32x8xf32, #tpu.memory_space<vmem>>, vector<32x8xf32>
    %cst_93 = arith.constant dense<0.000000e+00> : vector<16x8xf32>
    %490 = tpu.matmul %488, %489, %cst_93 {dimension_numbers = #tpu.dot_dimension_numbers<[1], [0], [0], [1], [0, 0, 1, 1], [], []>} : vector<16x32xf32>, vector<32x8xf32>, vector<16x8xf32> -> vector<16x8xf32>
    %c0_94 = arith.constant 0 : index
    %c0_95 = arith.constant 0 : index
    %491 = vector.load %arg6[%c0_94, %c0_95] : memref<1x8xf32, #tpu.memory_space<vmem>>, vector<1x8xf32>
    %492 = vector.broadcast %491 : vector<1x8xf32> to vector<16x8xf32>
    %493 = arith.addf %490, %492 : vector<16x8xf32>
    %c0_96 = arith.constant 0 : index
    %c0_97 = arith.constant 0 : index
    %494 = vector.load %arg7[%c0_96, %c0_97] : memref<16x8xf32, #tpu.memory_space<vmem>>, vector<16x8xf32>
    tpu.vector_store %arg7[%c0_96, %c0_97], %493 {strides = array<i32>} : memref<16x8xf32, #tpu.memory_space<vmem>>, vector<16x8xf32>,
    return
  }
}

</mosaic_0001>

<llo_original>
// kernel: decoder_forward.1
$region0: #{decoder_forward.1}
  #allocation0 [shape = 'u32[]', space=smem, size = 0x4, offset = 0x4, fixed_abs, tag = 'smem constant byte address 0x4 - core index']
  #allocation1 [shape = 'u32[72,128]{1,0:T(1,128)}', space=vmem, size = 0x9000, scoped, tag = 'internal scratch']
  %s0 = inlined_call_operand.vmem [shape: f32[8,2,16], index: 0, kind: input, shape index: {}]
  %s1 = inlined_call_operand.hbm [shape: f32[48,128], index: 1, kind: input, shape index: {}]
  %s2 = inlined_call_operand.hbm [shape: f32[1,128], index: 2, kind: input, shape index: {}]
  %s3 = inlined_call_operand.vmem [shape: f32[64,128], index: 3, kind: input, shape index: {}]
  %s4 = inlined_call_operand.vmem [shape: f32[1,128], index: 4, kind: input, shape index: {}]
  %s5 = inlined_call_operand.vmem [shape: f32[32,8], index: 5, kind: input, shape index: {}]
  %s6 = inlined_call_operand.vmem [shape: f32[1,8], index: 6, kind: input, shape index: {}]
  %s7 = inlined_call_operand.vmem [shape: f32[16,8], index: 7, kind: output, shape index: {}]
  %s8 = sld [smem:[#allocation0]]
  $region46: #{decoder_forward.1} parent=0
    _
  %s10 = ssub.s32 1, %s8
  %s11 = scalar_select 0, %s10, %s8
  $region1: #{decoder_forward.1} parent=0
    #allocation2 [shape = 'u8[24576]{0}', space=vmem, size = 0x6000, scoped, tag = 'input window, operand 1, single buffered']
    #allocation3 [shape = 's32[1]{0}', space=sflag, size = 0x4, scoped, tag = 'scoped memory for decoder_forward.1']
    #allocation4 [shape = 'u8[512]{0}', space=vmem, size = 0x400, scoped, tag = 'input window, operand 2, single buffered']
    #allocation5 [shape = 's32[1]{0}', space=sflag, size = 0x4, scoped, tag = 'scoped memory for decoder_forward.1']
    %12 = vsyncpa [#allocation3], 0
    %13 = vsyncpa [#allocation5], 0
    // Predicated region
    $region2: #{decoder_forward.1} parent=1 // pred_check
      _
    $region3: #{decoder_forward.1} parent=1 // pred_check_branch
      %15 = sbr.rel (0) target = $region5
    $region4: #{decoder_forward.1} parent=1 // pred_region
      _
    $region5: #{decoder_forward.1} parent=1 // pred_fallthru
      _
    // Predicated region
    $region6: #{decoder_forward.1} parent=1 // pred_check
      _
    $region7: #{decoder_forward.1} parent=1 // pred_check_branch
      %17 = sbr.rel (0) target = $region9
    $region8: #{decoder_forward.1} parent=1 // pred_region
      %19 = vsyncadd [#allocation3], 0
      %s20 = sshll.u32 %s1, 4
      %s21 = int_to_ptr.hbm [resolvable:$true] %s20
      %s22 = sshll.u32 [#allocation2], 4
      %s23 = int_to_ptr.vmem [resolvable:$true] %s22
      %28 = dma.hbm_to_vmem [thread:$0]  %s21, 768, %s23, [#allocation3], 128, 128, 8
    $region9: #{decoder_forward.1} parent=1 // pred_fallthru
      _
    // Predicated region
    $region10: #{decoder_forward.1} parent=1 // pred_check
      _
    $region11: #{decoder_forward.1} parent=1 // pred_check_branch
      %30 = sbr.rel (0) target = $region13
    $region12: #{decoder_forward.1} parent=1 // pred_region
      %32 = vsyncadd [#allocation5], 0
      %s34 = sshll.u32 %s2, 4
      %s35 = int_to_ptr.hbm [resolvable:$true] %s34
      %s36 = sshll.u32 [#allocation4], 4
      %s37 = int_to_ptr.vmem [resolvable:$true] %s36
      %39 = dma.hbm_to_vmem [thread:$0]  %s35, 16, %s37, [#allocation5]
    $region13: #{decoder_forward.1} parent=1 // pred_fallthru
      _
    // Predicated region
    $region14: #{decoder_forward.1} parent=1 // pred_check
      _
    $region15: #{decoder_forward.1} parent=1 // pred_check_branch
      %41 = sbr.rel (0) target = $region17
    $region16: #{decoder_forward.1} parent=1 // pred_region
      _
    $region17: #{decoder_forward.1} parent=1 // pred_fallthru
      _
    // Predicated region
    $region18: #{decoder_forward.1} parent=1 // pred_check
      _
    $region19: #{decoder_forward.1} parent=1 // pred_check_branch
      %43 = sbr.rel (0) target = $region21
    $region20: #{decoder_forward.1} parent=1 // pred_region
      _
    $region21: #{decoder_forward.1} parent=1 // pred_fallthru
      _
    // Predicated region
    $region22: #{decoder_forward.1} parent=1 // pred_check
      _
    $region23: #{decoder_forward.1} parent=1 // pred_check_branch
      %45 = sbr.rel (0) target = $region25
    $region24: #{decoder_forward.1} parent=1 // pred_region
      _
    $region25: #{decoder_forward.1} parent=1 // pred_fallthru
      _
    // Predicated region
    $region26: #{decoder_forward.1} parent=1 // pred_check
      _
    $region27: #{decoder_forward.1} parent=1 // pred_check_branch
      %47 = sbr.rel (0) target = $region29
    $region28: #{decoder_forward.1} parent=1 // pred_region
      _
    $region29: #{decoder_forward.1} parent=1 // pred_fallthru
      _
    // Predicated region
    $region30: #{decoder_forward.1} parent=1 // pred_check
      _
    $region31: #{decoder_forward.1} parent=1 // pred_check_branch
      %49 = sbr.rel (0) target = $region33
    $region32: #{decoder_forward.1} parent=1 // pred_region
      %51 = dma.done [#allocation3], 768
    $region33: #{decoder_forward.1} parent=1 // pred_fallthru
      _
    // Predicated region
    $region34: #{decoder_forward.1} parent=1 // pred_check
      _
    $region35: #{decoder_forward.1} parent=1 // pred_check_branch
      %53 = sbr.rel (0) target = $region37
    $region36: #{decoder_forward.1} parent=1 // pred_region
      %55 = dma.done [#allocation5], 16
    $region37: #{decoder_forward.1} parent=1 // pred_fallthru
      _
    %v56 = vld [vmem:[#allocation2] sm:$0xff]
    %v57 = vld [vmem:[#allocation2 + $0x8] sm:$0xff]
    %v58 = vld [vmem:[#allocation2 + $0x10] sm:$0xff]
    %v59 = vld [vmem:[#allocation2 + $0x18] sm:$0xff]
    %v60 = vld [vmem:[#allocation2 + $0x20] sm:$0xff]
    %v61 = vld [vmem:[#allocation2 + $0x28] sm:$0xff]
    %v62 = vld [vmem:[#allocation4] sm:$0x1]
    %v63 = vld [vmem:[%s3] sm:$0xff]
    %v64 = vld [vmem:[%s3 + $0x8] sm:$0xff]
    %v65 = vld [vmem:[%s3 + $0x10] sm:$0xff]
    %v66 = vld [vmem:[%s3 + $0x18] sm:$0xff]
    %v67 = vld [vmem:[%s3 + $0x20] sm:$0xff]
    %v68 = vld [vmem:[%s3 + $0x28] sm:$0xff]
    %v69 = vld [vmem:[%s3 + $0x30] sm:$0xff]
    %v70 = vld [vmem:[%s3 + $0x38] sm:$0xff]
    %v71 = vld [vmem:[%s4] sm:$0x1]
    %v72 = vld [vmem:[%s0] sm:$0x3]
    %vm73 = vcmask 130048
    %v74 = vsel %vm73, %v72, 0.0
    %v76 = vperm.slane %v62, 0
    %vm78 = vcmask 392192
    %v80 = vsel %vm78, %v74, 0
    %82 = vmatpush.msra.mxu0 0.0
    %83 = vmatpush.msra.mxu0 0.0
    %84 = vmatpush.msra.mxu0 0.0
    %85 = vmatpush.msra.mxu0 0.0
    %86 = vmatpush.msra.mxu0 0.0
    %87 = vmatpush.msra.mxu0 0.0
    %88 = vmatpush.msra.mxu0 0.0
    %89 = vmatpush.msra.mxu0 0.0
    %90 = vmatpush.msra.mxu0 0.0
    %91 = vmatpush.msra.mxu0 0.0
    %92 = vmatpush.msra.mxu0 %v61
    %93 = vmatpush.msra.mxu0 %v60
    %94 = vmatpush.msra.mxu0 %v59
    %95 = vmatpush.msra.mxu0 %v58
    %96 = vmatpush.msra.mxu0 %v57
    %97 = vmatpush.msra.mxu0 %v56
    %98 = vmatmul.f32.gmra.mxu0 %v80
    %v99 = vpop.f32.mrf.mxu0
    %v100 = vadd.f32 %v76, %v99
    %101 = vdwg.mxu0
    %v102 = vxor.u32 %v100, 2147483648
    %v103 = vmul.f32 %v102, 1.442695
    %v104 = vpow.pop %v103
    %v105 = vadd.f32 %v104, 1.0
    %v106 = vrcp.pop %v105
    %v107 = vmul.f32 %v105, %v106
    %v108 = vsub.f32 1.0, %v107
    %v109 = vmul.f32 %v106, %v108
    %v110 = vadd.f32 %v106, %v109
    %vm111 = vweird.f32 %v105
    %vm112 = vweird.f32 %v106
    %vm113 = vmor %vm111, %vm112
    %v114 = vsel %vm113, %v106, %v110
    %v115 = vand.u32 2147483647, %v105
    %vm116 = vcmp.eq.f32.partialorder %v115, 8.507059e+37
    %v117 = vand.u32 %v105, 2147483648
    %v118 = vor.u32 1.1754944e-38, %v117
    %v119 = vsel %vm116, %v118, %v114
    %v120 = vmul.f32 1.0, %v119
    %v121 = vtanh.pop %v100
    %v122 = vmul.f32 %v120, 0.0
    %124 = vrot.lane.b32.xlu0 %v121, 64
    %v125 = vpop.permute.xlu0 %124
    %v127 = vmul.f32 %v120, %v125
    %129 = vrot.lane.b32.xlu0 %v127, 32
    %v130 = vpop.permute.xlu0 %129
    %v132 = vadd.f32 %v122, %v130
    %v133 = vtanh.pop %v132
    %135 = vrot.lane.b32.xlu0 %v133, 64
    %v136 = vpop.permute.xlu0 %135
    %v138 = vmul.f32 %v120, %v136
    %140 = vrot.lane.b32.xlu0 %v138, 32
    %v141 = vpop.permute.xlu0 %140
    %vm143 = vcmask 261120
    %v144 = vsel %vm143, %v141, 0.0
    %v146 = vperm.slane %v71, 0
    %vm148 = vcmask 523264
    %v150 = vsel %vm148, %v144, 0
    %152 = vmatpush.msra.mxu0 0.0
    %153 = vmatpush.msra.mxu0 0.0
    %154 = vmatpush.msra.mxu0 0.0
    %155 = vmatpush.msra.mxu0 0.0
    %156 = vmatpush.msra.mxu0 0.0
    %157 = vmatpush.msra.mxu0 0.0
    %158 = vmatpush.msra.mxu0 0.0
    %159 = vmatpush.msra.mxu0 0.0
    %160 = vmatpush.msra.mxu0 %v70
    %161 = vmatpush.msra.mxu0 %v69
    %162 = vmatpush.msra.mxu0 %v68
    %163 = vmatpush.msra.mxu0 %v67
    %164 = vmatpush.msra.mxu0 %v66
    %165 = vmatpush.msra.mxu0 %v65
    %166 = vmatpush.msra.mxu0 %v64
    %167 = vmatpush.msra.mxu0 %v63
    %168 = vmatmul.f32.gmra.mxu0 %v150
    %v169 = vpop.f32.mrf.mxu0
    %v170 = vadd.f32 %v146, %v169
    %171 = vdwg.mxu0
    %v172 = vxor.u32 %v170, 2147483648
    %v173 = vmul.f32 %v172, 1.442695
    %v174 = vpow.pop %v173
    %v175 = vadd.f32 %v174, 1.0
    %v176 = vrcp.pop %v175
    %v177 = vmul.f32 %v175, %v176
    %v178 = vsub.f32 1.0, %v177
    %v179 = vmul.f32 %v176, %v178
    %v180 = vadd.f32 %v176, %v179
    %vm181 = vweird.f32 %v175
    %vm182 = vweird.f32 %v176
    %vm183 = vmor %vm181, %vm182
    %v184 = vsel %vm183, %v176, %v180
    %v185 = vand.u32 2147483647, %v175
    %vm186 = vcmp.eq.f32.partialorder %v185, 8.507059e+37
    %v187 = vand.u32 %v175, 2147483648
    %v188 = vor.u32 1.1754944e-38, %v187
    %v189 = vsel %vm186, %v188, %v184
    %v190 = vmul.f32 1.0, %v189
    %v191 = vtanh.pop %v170
    %v192 = vmul.f32 %v190, 0.0
    %194 = vrot.lane.b32.xlu0 %v191, 64
    %v195 = vpop.permute.xlu0 %194
    %v197 = vmul.f32 %v190, %v195
    %199 = vrot.lane.b32.xlu0 %v197, 32
    %v200 = vpop.permute.xlu0 %199
    %v202 = vadd.f32 %v192, %v200
    %v203 = vtanh.pop %v202
    %205 = vrot.lane.b32.xlu0 %v203, 64
    %v206 = vpop.permute.xlu0 %205
    %v208 = vmul.f32 %v190, %v206
    %s209 = scalar_lea.vmem %s0, 2
    %v210 = vld [vmem:[%s209] sm:$0x3]
    %211 = vrot.lane.b32.xlu0 %v138, 48
    %v212 = vpop.permute.xlu0 %211
    %v214 = vsel %vm73, %v210, %v212
    %v216 = vsel %vm78, %v214, 0
    %218 = vmatpush.msra.mxu0 0.0
    %219 = vmatpush.msra.mxu0 0.0
    %220 = vmatpush.msra.mxu0 0.0
    %221 = vmatpush.msra.mxu0 0.0
    %222 = vmatpush.msra.mxu0 0.0
    %223 = vmatpush.msra.mxu0 0.0
    %224 = vmatpush.msra.mxu0 0.0
    %225 = vmatpush.msra.mxu0 0.0
    %226 = vmatpush.msra.mxu0 0.0
    %227 = vmatpush.msra.mxu0 0.0
    %228 = vmatpush.msra.mxu0 %v61
    %229 = vmatpush.msra.mxu0 %v60
    %230 = vmatpush.msra.mxu0 %v59
    %231 = vmatpush.msra.mxu0 %v58
    %232 = vmatpush.msra.mxu0 %v57
    %233 = vmatpush.msra.mxu0 %v56
    %234 = vmatmul.f32.gmra.mxu0 %v216
    %v235 = vpop.f32.mrf.mxu0
    %v236 = vadd.f32 %v76, %v235
    %237 = vdwg.mxu0
    %v238 = vxor.u32 %v236, 2147483648
    %v239 = vmul.f32 %v238, 1.442695
    %v240 = vpow.pop %v239
    %v241 = vadd.f32 %v240, 1.0
    %v242 = vrcp.pop %v241
    %v243 = vmul.f32 %v241, %v242
    %v244 = vsub.f32 1.0, %v243
    %v245 = vmul.f32 %v242, %v244
    %v246 = vadd.f32 %v242, %v245
    %vm247 = vweird.f32 %v241
    %vm248 = vweird.f32 %v242
    %vm249 = vmor %vm247, %vm248
    %v250 = vsel %vm249, %v242, %v246
    %v251 = vand.u32 2147483647, %v241
    %vm252 = vcmp.eq.f32.partialorder %v251, 8.507059e+37
    %v253 = vand.u32 %v241, 2147483648
    %v254 = vor.u32 1.1754944e-38, %v253
    %v255 = vsel %vm252, %v254, %v250
    %v256 = vmul.f32 1.0, %v255
    %v257 = vtanh.pop %v236
    %v258 = vmul.f32 %v256, %v132
    %260 = vrot.lane.b32.xlu0 %v257, 64
    %v261 = vpop.permute.xlu0 %260
    %v263 = vmul.f32 %v256, %v261
    %265 = vrot.lane.b32.xlu0 %v263, 32
    %v266 = vpop.permute.xlu0 %265
    %v268 = vadd.f32 %v258, %v266
    %v269 = vtanh.pop %v268
    %271 = vrot.lane.b32.xlu0 %v269, 64
    %v272 = vpop.permute.xlu0 %271
    %v274 = vmul.f32 %v256, %v272
    %276 = vrot.lane.b32.xlu0 %v274, 32
    %v277 = vpop.permute.xlu0 %276
    %280 = vrot.lane.b32.xlu0 %v208, 64
    %v281 = vpop.permute.xlu0 %280
    %v283 = vsel %vm143, %v277, %v281
    %v285 = vsel %vm148, %v283, 0
    %287 = vmatpush.msra.mxu0 0.0
    %288 = vmatpush.msra.mxu0 0.0
    %289 = vmatpush.msra.mxu0 0.0
    %290 = vmatpush.msra.mxu0 0.0
    %291 = vmatpush.msra.mxu0 0.0
    %292 = vmatpush.msra.mxu0 0.0
    %293 = vmatpush.msra.mxu0 0.0
    %294 = vmatpush.msra.mxu0 0.0
    %295 = vmatpush.msra.mxu0 %v70
    %296 = vmatpush.msra.mxu0 %v69
    %297 = vmatpush.msra.mxu0 %v68
    %298 = vmatpush.msra.mxu0 %v67
    %299 = vmatpush.msra.mxu0 %v66
    %300 = vmatpush.msra.mxu0 %v65
    %301 = vmatpush.msra.mxu0 %v64
    %302 = vmatpush.msra.mxu0 %v63
    %303 = vmatmul.f32.gmra.mxu0 %v285
    %v304 = vpop.f32.mrf.mxu0
    %v305 = vadd.f32 %v146, %v304
    %306 = vdwg.mxu0
    %v307 = vxor.u32 %v305, 2147483648
    %v308 = vmul.f32 %v307, 1.442695
    %v309 = vpow.pop %v308
    %v310 = vadd.f32 %v309, 1.0
    %v311 = vrcp.pop %v310
    %v312 = vmul.f32 %v310, %v311
    %v313 = vsub.f32 1.0, %v312
    %v314 = vmul.f32 %v311, %v313
    %v315 = vadd.f32 %v311, %v314
    %vm316 = vweird.f32 %v310
    %vm317 = vweird.f32 %v311
    %vm318 = vmor %vm316, %vm317
    %v319 = vsel %vm318, %v311, %v315
    %v320 = vand.u32 2147483647, %v310
    %vm321 = vcmp.eq.f32.partialorder %v320, 8.507059e+37
    %v322 = vand.u32 %v310, 2147483648
    %v323 = vor.u32 1.1754944e-38, %v322
    %v324 = vsel %vm321, %v323, %v319
    %v325 = vmul.f32 1.0, %v324
    %v326 = vtanh.pop %v305
    %v327 = vmul.f32 %v325, %v202
    %329 = vrot.lane.b32.xlu0 %v326, 64
    %v330 = vpop.permute.xlu0 %329
    %v332 = vmul.f32 %v325, %v330
    %334 = vrot.lane.b32.xlu0 %v332, 32
    %v335 = vpop.permute.xlu0 %334
    %v337 = vadd.f32 %v327, %v335
    %v338 = vtanh.pop %v337
    %340 = vrot.lane.b32.xlu0 %v338, 64
    %v341 = vpop.permute.xlu0 %340
    %v343 = vmul.f32 %v325, %v341
    %s344 = scalar_lea.vmem %s0, 4
    %v345 = vld [vmem:[%s344] sm:$0x3]
    %346 = vrot.lane.b32.xlu0 %v274, 48
    %v347 = vpop.permute.xlu0 %346
    %v349 = vsel %vm73, %v345, %v347
    %v351 = vsel %vm78, %v349, 0
    %353 = vmatpush.msra.mxu0 0.0
    %354 = vmatpush.msra.mxu0 0.0
    %355 = vmatpush.msra.mxu0 0.0
    %356 = vmatpush.msra.mxu0 0.0
    %357 = vmatpush.msra.mxu0 0.0
    %358 = vmatpush.msra.mxu0 0.0
    %359 = vmatpush.msra.mxu0 0.0
    %360 = vmatpush.msra.mxu0 0.0
    %361 = vmatpush.msra.mxu0 0.0
    %362 = vmatpush.msra.mxu0 0.0
    %363 = vmatpush.msra.mxu0 %v61
    %364 = vmatpush.msra.mxu0 %v60
    %365 = vmatpush.msra.mxu0 %v59
    %366 = vmatpush.msra.mxu0 %v58
    %367 = vmatpush.msra.mxu0 %v57
    %368 = vmatpush.msra.mxu0 %v56
    %369 = vmatmul.f32.gmra.mxu0 %v351
    %v370 = vpop.f32.mrf.mxu0
    %v371 = vadd.f32 %v76, %v370
    %372 = vdwg.mxu0
    %v373 = vxor.u32 %v371, 2147483648
    %v374 = vmul.f32 %v373, 1.442695
    %v375 = vpow.pop %v374
    %v376 = vadd.f32 %v375, 1.0
    %v377 = vrcp.pop %v376
    %v378 = vmul.f32 %v376, %v377
    %v379 = vsub.f32 1.0, %v378
    %v380 = vmul.f32 %v377, %v379
    %v381 = vadd.f32 %v377, %v380
    %vm382 = vweird.f32 %v376
    %vm383 = vweird.f32 %v377
    %vm384 = vmor %vm382, %vm383
    %v385 = vsel %vm384, %v377, %v381
    %v386 = vand.u32 2147483647, %v376
    %vm387 = vcmp.eq.f32.partialorder %v386, 8.507059e+37
    %v388 = vand.u32 %v376, 2147483648
    %v389 = vor.u32 1.1754944e-38, %v388
    %v390 = vsel %vm387, %v389, %v385
    %v391 = vmul.f32 1.0, %v390
    %v392 = vtanh.pop %v371
    %v393 = vmul.f32 %v391, %v268
    %395 = vrot.lane.b32.xlu0 %v392, 64
    %v396 = vpop.permute.xlu0 %395
    %v398 = vmul.f32 %v391, %v396
    %400 = vrot.lane.b32.xlu0 %v398, 32
    %v401 = vpop.permute.xlu0 %400
    %v403 = vadd.f32 %v393, %v401
    %v404 = vtanh.pop %v403
    %406 = vrot.lane.b32.xlu0 %v404, 64
    %v407 = vpop.permute.xlu0 %406
    %v409 = vmul.f32 %v391, %v407
    %411 = vrot.lane.b32.xlu0 %v409, 32
    %v412 = vpop.permute.xlu0 %411
    %415 = vrot.lane.b32.xlu0 %v343, 64
    %v416 = vpop.permute.xlu0 %415
    %v418 = vsel %vm143, %v412, %v416
    %v420 = vsel %vm148, %v418, 0
    %422 = vmatpush.msra.mxu0 0.0
    %423 = vmatpush.msra.mxu0 0.0
    %424 = vmatpush.msra.mxu0 0.0
    %425 = vmatpush.msra.mxu0 0.0
    %426 = vmatpush.msra.mxu0 0.0
    %427 = vmatpush.msra.mxu0 0.0
    %428 = vmatpush.msra.mxu0 0.0
    %429 = vmatpush.msra.mxu0 0.0
    %430 = vmatpush.msra.mxu0 %v70
    %431 = vmatpush.msra.mxu0 %v69
    %432 = vmatpush.msra.mxu0 %v68
    %433 = vmatpush.msra.mxu0 %v67
    %434 = vmatpush.msra.mxu0 %v66
    %435 = vmatpush.msra.mxu0 %v65
    %436 = vmatpush.msra.mxu0 %v64
    %437 = vmatpush.msra.mxu0 %v63
    %438 = vmatmul.f32.gmra.mxu0 %v420
    %v439 = vpop.f32.mrf.mxu0
    %v440 = vadd.f32 %v146, %v439
    %441 = vdwg.mxu0
    %v442 = vxor.u32 %v440, 2147483648
    %v443 = vmul.f32 %v442, 1.442695
    %v444 = vpow.pop %v443
    %v445 = vadd.f32 %v444, 1.0
    %v446 = vrcp.pop %v445
    %v447 = vmul.f32 %v445, %v446
    %v448 = vsub.f32 1.0, %v447
    %v449 = vmul.f32 %v446, %v448
    %v450 = vadd.f32 %v446, %v449
    %vm451 = vweird.f32 %v445
    %vm452 = vweird.f32 %v446
    %vm453 = vmor %vm451, %vm452
    %v454 = vsel %vm453, %v446, %v450
    %v455 = vand.u32 2147483647, %v445
    %vm456 = vcmp.eq.f32.partialorder %v455, 8.507059e+37
    %v457 = vand.u32 %v445, 2147483648
    %v458 = vor.u32 1.1754944e-38, %v457
    %v459 = vsel %vm456, %v458, %v454
    %v460 = vmul.f32 1.0, %v459
    %v461 = vtanh.pop %v440
    %v462 = vmul.f32 %v460, %v337
    %464 = vrot.lane.b32.xlu0 %v461, 64
    %v465 = vpop.permute.xlu0 %464
    %v467 = vmul.f32 %v460, %v465
    %469 = vrot.lane.b32.xlu0 %v467, 32
    %v470 = vpop.permute.xlu0 %469
    %v472 = vadd.f32 %v462, %v470
    %v473 = vtanh.pop %v472
    %475 = vrot.lane.b32.xlu0 %v473, 64
    %v476 = vpop.permute.xlu0 %475
    %v478 = vmul.f32 %v460, %v476
    %s479 = scalar_lea.vmem %s0, 6
    %v480 = vld [vmem:[%s479] sm:$0x3]
    %481 = vrot.lane.b32.xlu0 %v409, 48
    %v482 = vpop.permute.xlu0 %481
    %v484 = vsel %vm73, %v480, %v482
    %v486 = vsel %vm78, %v484, 0
    %488 = vmatpush.msra.mxu0 0.0
    %489 = vmatpush.msra.mxu0 0.0
    %490 = vmatpush.msra.mxu0 0.0
    %491 = vmatpush.msra.mxu0 0.0
    %492 = vmatpush.msra.mxu0 0.0
    %493 = vmatpush.msra.mxu0 0.0
    %494 = vmatpush.msra.mxu0 0.0
    %495 = vmatpush.msra.mxu0 0.0
    %496 = vmatpush.msra.mxu0 0.0
    %497 = vmatpush.msra.mxu0 0.0
    %498 = vmatpush.msra.mxu0 %v61
    %499 = vmatpush.msra.mxu0 %v60
    %500 = vmatpush.msra.mxu0 %v59
    %501 = vmatpush.msra.mxu0 %v58
    %502 = vmatpush.msra.mxu0 %v57
    %503 = vmatpush.msra.mxu0 %v56
    %504 = vmatmul.f32.gmra.mxu0 %v486
    %v505 = vpop.f32.mrf.mxu0
    %v506 = vadd.f32 %v76, %v505
    %507 = vdwg.mxu0
    %v508 = vxor.u32 %v506, 2147483648
    %v509 = vmul.f32 %v508, 1.442695
    %v510 = vpow.pop %v509
    %v511 = vadd.f32 %v510, 1.0
    %v512 = vrcp.pop %v511
    %v513 = vmul.f32 %v511, %v512
    %v514 = vsub.f32 1.0, %v513
    %v515 = vmul.f32 %v512, %v514
    %v516 = vadd.f32 %v512, %v515
    %vm517 = vweird.f32 %v511
    %vm518 = vweird.f32 %v512
    %vm519 = vmor %vm517, %vm518
    %v520 = vsel %vm519, %v512, %v516
    %v521 = vand.u32 2147483647, %v511
    %vm522 = vcmp.eq.f32.partialorder %v521, 8.507059e+37
    %v523 = vand.u32 %v511, 2147483648
    %v524 = vor.u32 1.1754944e-38, %v523
    %v525 = vsel %vm522, %v524, %v520
    %v526 = vmul.f32 1.0, %v525
    %v527 = vtanh.pop %v506
    %v528 = vmul.f32 %v526, %v403
    %530 = vrot.lane.b32.xlu0 %v527, 64
    %v531 = vpop.permute.xlu0 %530
    %v533 = vmul.f32 %v526, %v531
    %535 = vrot.lane.b32.xlu0 %v533, 32
    %v536 = vpop.permute.xlu0 %535
    %v538 = vadd.f32 %v528, %v536
    %v539 = vtanh.pop %v538
    %541 = vrot.lane.b32.xlu0 %v539, 64
    %v542 = vpop.permute.xlu0 %541
    %v544 = vmul.f32 %v526, %v542
    %546 = vrot.lane.b32.xlu0 %v544, 32
    %v547 = vpop.permute.xlu0 %546
    %550 = vrot.lane.b32.xlu0 %v478, 64
    %v551 = vpop.permute.xlu0 %550
    %v553 = vsel %vm143, %v547, %v551
    %v555 = vsel %vm148, %v553, 0
    %557 = vmatpush.msra.mxu0 0.0
    %558 = vmatpush.msra.mxu0 0.0
    %559 = vmatpush.msra.mxu0 0.0
    %560 = vmatpush.msra.mxu0 0.0
    %561 = vmatpush.msra.mxu0 0.0
    %562 = vmatpush.msra.mxu0 0.0
    %563 = vmatpush.msra.mxu0 0.0
    %564 = vmatpush.msra.mxu0 0.0
    %565 = vmatpush.msra.mxu0 %v70
    %566 = vmatpush.msra.mxu0 %v69
    %567 = vmatpush.msra.mxu0 %v68
    %568 = vmatpush.msra.mxu0 %v67
    %569 = vmatpush.msra.mxu0 %v66
    %570 = vmatpush.msra.mxu0 %v65
    %571 = vmatpush.msra.mxu0 %v64
    %572 = vmatpush.msra.mxu0 %v63
    %573 = vmatmul.f32.gmra.mxu0 %v555
    %v574 = vpop.f32.mrf.mxu0
    %v575 = vadd.f32 %v146, %v574
    %576 = vdwg.mxu0
    %v577 = vxor.u32 %v575, 2147483648
    %v578 = vmul.f32 %v577, 1.442695
    %v579 = vpow.pop %v578
    %v580 = vadd.f32 %v579, 1.0
    %v581 = vrcp.pop %v580
    %v582 = vmul.f32 %v580, %v581
    %v583 = vsub.f32 1.0, %v582
    %v584 = vmul.f32 %v581, %v583
    %v585 = vadd.f32 %v581, %v584
    %vm586 = vweird.f32 %v580
    %vm587 = vweird.f32 %v581
    %vm588 = vmor %vm586, %vm587
    %v589 = vsel %vm588, %v581, %v585
    %v590 = vand.u32 2147483647, %v580
    %vm591 = vcmp.eq.f32.partialorder %v590, 8.507059e+37
    %v592 = vand.u32 %v580, 2147483648
    %v593 = vor.u32 1.1754944e-38, %v592
    %v594 = vsel %vm591, %v593, %v589
    %v595 = vmul.f32 1.0, %v594
    %v596 = vtanh.pop %v575
    %v597 = vmul.f32 %v595, %v472
    %599 = vrot.lane.b32.xlu0 %v596, 64
    %v600 = vpop.permute.xlu0 %599
    %v602 = vmul.f32 %v595, %v600
    %604 = vrot.lane.b32.xlu0 %v602, 32
    %v605 = vpop.permute.xlu0 %604
    %v607 = vadd.f32 %v597, %v605
    %v608 = vtanh.pop %v607
    %610 = vrot.lane.b32.xlu0 %v608, 64
    %v611 = vpop.permute.xlu0 %610
    %v613 = vmul.f32 %v595, %v611
    %s614 = scalar_lea.vmem %s0, 8
    %v615 = vld [vmem:[%s614] sm:$0x3]
    %616 = vrot.lane.b32.xlu0 %v544, 48
    %v617 = vpop.permute.xlu0 %616
    %v619 = vsel %vm73, %v615, %v617
    %v621 = vsel %vm78, %v619, 0
    %623 = vmatpush.msra.mxu0 0.0
    %624 = vmatpush.msra.mxu0 0.0
    %625 = vmatpush.msra.mxu0 0.0
    %626 = vmatpush.msra.mxu0 0.0
    %627 = vmatpush.msra.mxu0 0.0
    %628 = vmatpush.msra.mxu0 0.0
    %629 = vmatpush.msra.mxu0 0.0
    %630 = vmatpush.msra.mxu0 0.0
    %631 = vmatpush.msra.mxu0 0.0
    %632 = vmatpush.msra.mxu0 0.0
    %633 = vmatpush.msra.mxu0 %v61
    %634 = vmatpush.msra.mxu0 %v60
    %635 = vmatpush.msra.mxu0 %v59
    %636 = vmatpush.msra.mxu0 %v58
    %637 = vmatpush.msra.mxu0 %v57
    %638 = vmatpush.msra.mxu0 %v56
    %639 = vmatmul.f32.gmra.mxu0 %v621
    %v640 = vpop.f32.mrf.mxu0
    %v641 = vadd.f32 %v76, %v640
    %642 = vdwg.mxu0
    %v643 = vxor.u32 %v641, 2147483648
    %v644 = vmul.f32 %v643, 1.442695
    %v645 = vpow.pop %v644
    %v646 = vadd.f32 %v645, 1.0
    %v647 = vrcp.pop %v646
    %v648 = vmul.f32 %v646, %v647
    %v649 = vsub.f32 1.0, %v648
    %v650 = vmul.f32 %v647, %v649
    %v651 = vadd.f32 %v647, %v650
    %vm652 = vweird.f32 %v646
    %vm653 = vweird.f32 %v647
    %vm654 = vmor %vm652, %vm653
    %v655 = vsel %vm654, %v647, %v651
    %v656 = vand.u32 2147483647, %v646
    %vm657 = vcmp.eq.f32.partialorder %v656, 8.507059e+37
    %v658 = vand.u32 %v646, 2147483648
    %v659 = vor.u32 1.1754944e-38, %v658
    %v660 = vsel %vm657, %v659, %v655
    %v661 = vmul.f32 1.0, %v660
    %v662 = vtanh.pop %v641
    %v663 = vmul.f32 %v661, %v538
    %665 = vrot.lane.b32.xlu0 %v662, 64
    %v666 = vpop.permute.xlu0 %665
    %v668 = vmul.f32 %v661, %v666
    %670 = vrot.lane.b32.xlu0 %v668, 32
    %v671 = vpop.permute.xlu0 %670
    %v673 = vadd.f32 %v663, %v671
    %v674 = vtanh.pop %v673
    %676 = vrot.lane.b32.xlu0 %v674, 64
    %v677 = vpop.permute.xlu0 %676
    %v679 = vmul.f32 %v661, %v677
    %681 = vrot.lane.b32.xlu0 %v679, 32
    %v682 = vpop.permute.xlu0 %681
    %685 = vrot.lane.b32.xlu0 %v613, 64
    %v686 = vpop.permute.xlu0 %685
    %v688 = vsel %vm143, %v682, %v686
    %v690 = vsel %vm148, %v688, 0
    %692 = vmatpush.msra.mxu0 0.0
    %693 = vmatpush.msra.mxu0 0.0
    %694 = vmatpush.msra.mxu0 0.0
    %695 = vmatpush.msra.mxu0 0.0
    %696 = vmatpush.msra.mxu0 0.0
    %697 = vmatpush.msra.mxu0 0.0
    %698 = vmatpush.msra.mxu0 0.0
    %699 = vmatpush.msra.mxu0 0.0
    %700 = vmatpush.msra.mxu0 %v70
    %701 = vmatpush.msra.mxu0 %v69
    %702 = vmatpush.msra.mxu0 %v68
    %703 = vmatpush.msra.mxu0 %v67
    %704 = vmatpush.msra.mxu0 %v66
    %705 = vmatpush.msra.mxu0 %v65
    %706 = vmatpush.msra.mxu0 %v64
    %707 = vmatpush.msra.mxu0 %v63
    %708 = vmatmul.f32.gmra.mxu0 %v690
    %v709 = vpop.f32.mrf.mxu0
    %v710 = vadd.f32 %v146, %v709
    %711 = vdwg.mxu0
    %v712 = vxor.u32 %v710, 2147483648
    %v713 = vmul.f32 %v712, 1.442695
    %v714 = vpow.pop %v713
    %v715 = vadd.f32 %v714, 1.0
    %v716 = vrcp.pop %v715
    %v717 = vmul.f32 %v715, %v716
    %v718 = vsub.f32 1.0, %v717
    %v719 = vmul.f32 %v716, %v718
    %v720 = vadd.f32 %v716, %v719
    %vm721 = vweird.f32 %v715
    %vm722 = vweird.f32 %v716
    %vm723 = vmor %vm721, %vm722
    %v724 = vsel %vm723, %v716, %v720
    %v725 = vand.u32 2147483647, %v715
    %vm726 = vcmp.eq.f32.partialorder %v725, 8.507059e+37
    %v727 = vand.u32 %v715, 2147483648
    %v728 = vor.u32 1.1754944e-38, %v727
    %v729 = vsel %vm726, %v728, %v724
    %v730 = vmul.f32 1.0, %v729
    %v731 = vtanh.pop %v710
    %v732 = vmul.f32 %v730, %v607
    %734 = vrot.lane.b32.xlu0 %v731, 64
    %v735 = vpop.permute.xlu0 %734
    %v737 = vmul.f32 %v730, %v735
    %739 = vrot.lane.b32.xlu0 %v737, 32
    %v740 = vpop.permute.xlu0 %739
    %v742 = vadd.f32 %v732, %v740
    %v743 = vtanh.pop %v742
    %745 = vrot.lane.b32.xlu0 %v743, 64
    %v746 = vpop.permute.xlu0 %745
    %v748 = vmul.f32 %v730, %v746
    %s749 = scalar_lea.vmem %s0, 10
    %v750 = vld [vmem:[%s749] sm:$0x3]
    %751 = vrot.lane.b32.xlu0 %v679, 48
    %v752 = vpop.permute.xlu0 %751
    %v754 = vsel %vm73, %v750, %v752
    %v756 = vsel %vm78, %v754, 0
    %758 = vmatpush.msra.mxu0 0.0
    %759 = vmatpush.msra.mxu0 0.0
    %760 = vmatpush.msra.mxu0 0.0
    %761 = vmatpush.msra.mxu0 0.0
    %762 = vmatpush.msra.mxu0 0.0
    %763 = vmatpush.msra.mxu0 0.0
    %764 = vmatpush.msra.mxu0 0.0
    %765 = vmatpush.msra.mxu0 0.0
    %766 = vmatpush.msra.mxu0 0.0
    %767 = vmatpush.msra.mxu0 0.0
    %768 = vmatpush.msra.mxu0 %v61
    %769 = vmatpush.msra.mxu0 %v60
    %770 = vmatpush.msra.mxu0 %v59
    %771 = vmatpush.msra.mxu0 %v58
    %772 = vmatpush.msra.mxu0 %v57
    %773 = vmatpush.msra.mxu0 %v56
    %774 = vmatmul.f32.gmra.mxu0 %v756
    %v775 = vpop.f32.mrf.mxu0
    %v776 = vadd.f32 %v76, %v775
    %777 = vdwg.mxu0
    %v778 = vxor.u32 %v776, 2147483648
    %v779 = vmul.f32 %v778, 1.442695
    %v780 = vpow.pop %v779
    %v781 = vadd.f32 %v780, 1.0
    %v782 = vrcp.pop %v781
    %v783 = vmul.f32 %v781, %v782
    %v784 = vsub.f32 1.0, %v783
    %v785 = vmul.f32 %v782, %v784
    %v786 = vadd.f32 %v782, %v785
    %vm787 = vweird.f32 %v781
    %vm788 = vweird.f32 %v782
    %vm789 = vmor %vm787, %vm788
    %v790 = vsel %vm789, %v782, %v786
    %v791 = vand.u32 2147483647, %v781
    %vm792 = vcmp.eq.f32.partialorder %v791, 8.507059e+37
    %v793 = vand.u32 %v781, 2147483648
    %v794 = vor.u32 1.1754944e-38, %v793
    %v795 = vsel %vm792, %v794, %v790
    %v796 = vmul.f32 1.0, %v795
    %v797 = vtanh.pop %v776
    %v798 = vmul.f32 %v796, %v673
    %800 = vrot.lane.b32.xlu0 %v797, 64
    %v801 = vpop.permute.xlu0 %800
    %v803 = vmul.f32 %v796, %v801
    %805 = vrot.lane.b32.xlu0 %v803, 32
    %v806 = vpop.permute.xlu0 %805
    %v808 = vadd.f32 %v798, %v806
    %v809 = vtanh.pop %v808
    %811 = vrot.lane.b32.xlu0 %v809, 64
    %v812 = vpop.permute.xlu0 %811
    %v814 = vmul.f32 %v796, %v812
    %816 = vrot.lane.b32.xlu0 %v814, 32
    %v817 = vpop.permute.xlu0 %816
    %820 = vrot.lane.b32.xlu0 %v748, 64
    %v821 = vpop.permute.xlu0 %820
    %v823 = vsel %vm143, %v817, %v821
    %v825 = vsel %vm148, %v823, 0
    %827 = vmatpush.msra.mxu0 0.0
    %828 = vmatpush.msra.mxu0 0.0
    %829 = vmatpush.msra.mxu0 0.0
    %830 = vmatpush.msra.mxu0 0.0
    %831 = vmatpush.msra.mxu0 0.0
    %832 = vmatpush.msra.mxu0 0.0
    %833 = vmatpush.msra.mxu0 0.0
    %834 = vmatpush.msra.mxu0 0.0
    %835 = vmatpush.msra.mxu0 %v70
    %836 = vmatpush.msra.mxu0 %v69
    %837 = vmatpush.msra.mxu0 %v68
    %838 = vmatpush.msra.mxu0 %v67
    %839 = vmatpush.msra.mxu0 %v66
    %840 = vmatpush.msra.mxu0 %v65
    %841 = vmatpush.msra.mxu0 %v64
    %842 = vmatpush.msra.mxu0 %v63
    %843 = vmatmul.f32.gmra.mxu0 %v825
    %v844 = vpop.f32.mrf.mxu0
    %v845 = vadd.f32 %v146, %v844
    %846 = vdwg.mxu0
    %v847 = vxor.u32 %v845, 2147483648
    %v848 = vmul.f32 %v847, 1.442695
    %v849 = vpow.pop %v848
    %v850 = vadd.f32 %v849, 1.0
    %v851 = vrcp.pop %v850
    %v852 = vmul.f32 %v850, %v851
    %v853 = vsub.f32 1.0, %v852
    %v854 = vmul.f32 %v851, %v853
    %v855 = vadd.f32 %v851, %v854
    %vm856 = vweird.f32 %v850
    %vm857 = vweird.f32 %v851
    %vm858 = vmor %vm856, %vm857
    %v859 = vsel %vm858, %v851, %v855
    %v860 = vand.u32 2147483647, %v850
    %vm861 = vcmp.eq.f32.partialorder %v860, 8.507059e+37
    %v862 = vand.u32 %v850, 2147483648
    %v863 = vor.u32 1.1754944e-38, %v862
    %v864 = vsel %vm861, %v863, %v859
    %v865 = vmul.f32 1.0, %v864
    %v866 = vtanh.pop %v845
    %v867 = vmul.f32 %v865, %v742
    %869 = vrot.lane.b32.xlu0 %v866, 64
    %v870 = vpop.permute.xlu0 %869
    %v872 = vmul.f32 %v865, %v870
    %874 = vrot.lane.b32.xlu0 %v872, 32
    %v875 = vpop.permute.xlu0 %874
    %v877 = vadd.f32 %v867, %v875
    %v878 = vtanh.pop %v877
    %880 = vrot.lane.b32.xlu0 %v878, 64
    %v881 = vpop.permute.xlu0 %880
    %v883 = vmul.f32 %v865, %v881
    %s884 = scalar_lea.vmem %s0, 12
    %v885 = vld [vmem:[%s884] sm:$0x3]
    %886 = vrot.lane.b32.xlu0 %v814, 48
    %v887 = vpop.permute.xlu0 %886
    %v889 = vsel %vm73, %v885, %v887
    %v891 = vsel %vm78, %v889, 0
    %893 = vmatpush.msra.mxu0 0.0
    %894 = vmatpush.msra.mxu0 0.0
    %895 = vmatpush.msra.mxu0 0.0
    %896 = vmatpush.msra.mxu0 0.0
    %897 = vmatpush.msra.mxu0 0.0
    %898 = vmatpush.msra.mxu0 0.0
    %899 = vmatpush.msra.mxu0 0.0
    %900 = vmatpush.msra.mxu0 0.0
    %901 = vmatpush.msra.mxu0 0.0
    %902 = vmatpush.msra.mxu0 0.0
    %903 = vmatpush.msra.mxu0 %v61
    %904 = vmatpush.msra.mxu0 %v60
    %905 = vmatpush.msra.mxu0 %v59
    %906 = vmatpush.msra.mxu0 %v58
    %907 = vmatpush.msra.mxu0 %v57
    %908 = vmatpush.msra.mxu0 %v56
    %909 = vmatmul.f32.gmra.mxu0 %v891
    %v910 = vpop.f32.mrf.mxu0
    %v911 = vadd.f32 %v76, %v910
    %912 = vdwg.mxu0
    %v913 = vxor.u32 %v911, 2147483648
    %v914 = vmul.f32 %v913, 1.442695
    %v915 = vpow.pop %v914
    %v916 = vadd.f32 %v915, 1.0
    %v917 = vrcp.pop %v916
    %v918 = vmul.f32 %v916, %v917
    %v919 = vsub.f32 1.0, %v918
    %v920 = vmul.f32 %v917, %v919
    %v921 = vadd.f32 %v917, %v920
    %vm922 = vweird.f32 %v916
    %vm923 = vweird.f32 %v917
    %vm924 = vmor %vm922, %vm923
    %v925 = vsel %vm924, %v917, %v921
    %v926 = vand.u32 2147483647, %v916
    %vm927 = vcmp.eq.f32.partialorder %v926, 8.507059e+37
    %v928 = vand.u32 %v916, 2147483648
    %v929 = vor.u32 1.1754944e-38, %v928
    %v930 = vsel %vm927, %v929, %v925
    %v931 = vmul.f32 1.0, %v930
    %v932 = vtanh.pop %v911
    %v933 = vmul.f32 %v931, %v808
    %935 = vrot.lane.b32.xlu0 %v932, 64
    %v936 = vpop.permute.xlu0 %935
    %v938 = vmul.f32 %v931, %v936
    %940 = vrot.lane.b32.xlu0 %v938, 32
    %v941 = vpop.permute.xlu0 %940
    %v943 = vadd.f32 %v933, %v941
    %v944 = vtanh.pop %v943
    %946 = vrot.lane.b32.xlu0 %v944, 64
    %v947 = vpop.permute.xlu0 %946
    %v949 = vmul.f32 %v931, %v947
    %951 = vrot.lane.b32.xlu0 %v949, 32
    %v952 = vpop.permute.xlu0 %951
    %955 = vrot.lane.b32.xlu0 %v883, 64
    %v956 = vpop.permute.xlu0 %955
    %v958 = vsel %vm143, %v952, %v956
    %v960 = vsel %vm148, %v958, 0
    %962 = vmatpush.msra.mxu0 0.0
    %963 = vmatpush.msra.mxu0 0.0
    %964 = vmatpush.msra.mxu0 0.0
    %965 = vmatpush.msra.mxu0 0.0
    %966 = vmatpush.msra.mxu0 0.0
    %967 = vmatpush.msra.mxu0 0.0
    %968 = vmatpush.msra.mxu0 0.0
    %969 = vmatpush.msra.mxu0 0.0
    %970 = vmatpush.msra.mxu0 %v70
    %971 = vmatpush.msra.mxu0 %v69
    %972 = vmatpush.msra.mxu0 %v68
    %973 = vmatpush.msra.mxu0 %v67
    %974 = vmatpush.msra.mxu0 %v66
    %975 = vmatpush.msra.mxu0 %v65
    %976 = vmatpush.msra.mxu0 %v64
    %977 = vmatpush.msra.mxu0 %v63
    %978 = vmatmul.f32.gmra.mxu0 %v960
    %v979 = vpop.f32.mrf.mxu0
    %v980 = vadd.f32 %v146, %v979
    %981 = vdwg.mxu0
    %v982 = vxor.u32 %v980, 2147483648
    %v983 = vmul.f32 %v982, 1.442695
    %v984 = vpow.pop %v983
    %v985 = vadd.f32 %v984, 1.0
    %v986 = vrcp.pop %v985
    %v987 = vmul.f32 %v985, %v986
    %v988 = vsub.f32 1.0, %v987
    %v989 = vmul.f32 %v986, %v988
    %v990 = vadd.f32 %v986, %v989
    %vm991 = vweird.f32 %v985
    %vm992 = vweird.f32 %v986
    %vm993 = vmor %vm991, %vm992
    %v994 = vsel %vm993, %v986, %v990
    %v995 = vand.u32 2147483647, %v985
    %vm996 = vcmp.eq.f32.partialorder %v995, 8.507059e+37
    %v997 = vand.u32 %v985, 2147483648
    %v998 = vor.u32 1.1754944e-38, %v997
    %v999 = vsel %vm996, %v998, %v994
    %v1000 = vmul.f32 1.0, %v999
    %v1001 = vtanh.pop %v980
    %v1002 = vmul.f32 %v1000, %v877
    %1004 = vrot.lane.b32.xlu0 %v1001, 64
    %v1005 = vpop.permute.xlu0 %1004
    %v1007 = vmul.f32 %v1000, %v1005
    %1009 = vrot.lane.b32.xlu0 %v1007, 32
    %v1010 = vpop.permute.xlu0 %1009
    %v1012 = vadd.f32 %v1002, %v1010
    %v1013 = vtanh.pop %v1012
    %1015 = vrot.lane.b32.xlu0 %v1013, 64
    %v1016 = vpop.permute.xlu0 %1015
    %v1018 = vmul.f32 %v1000, %v1016
    %s1019 = scalar_lea.vmem %s0, 14
    %v1020 = vld [vmem:[%s1019] sm:$0x3]
    %1021 = vrot.lane.b32.xlu0 %v949, 48
    %v1022 = vpop.permute.xlu0 %1021
    %v1024 = vsel %vm73, %v1020, %v1022
    %v1026 = vsel %vm78, %v1024, 0
    %1028 = vmatpush.msra.mxu0 0.0
    %1029 = vmatpush.msra.mxu0 0.0
    %1030 = vmatpush.msra.mxu0 0.0
    %1031 = vmatpush.msra.mxu0 0.0
    %1032 = vmatpush.msra.mxu0 0.0
    %1033 = vmatpush.msra.mxu0 0.0
    %1034 = vmatpush.msra.mxu0 0.0
    %1035 = vmatpush.msra.mxu0 0.0
    %1036 = vmatpush.msra.mxu0 0.0
    %1037 = vmatpush.msra.mxu0 0.0
    %1038 = vmatpush.msra.mxu0 %v61
    %1039 = vmatpush.msra.mxu0 %v60
    %1040 = vmatpush.msra.mxu0 %v59
    %1041 = vmatpush.msra.mxu0 %v58
    %1042 = vmatpush.msra.mxu0 %v57
    %1043 = vmatpush.msra.mxu0 %v56
    %1044 = vmatmul.f32.gmra.mxu0 %v1026
    %v1045 = vpop.f32.mrf.mxu0
    %v1046 = vadd.f32 %v76, %v1045
    %1047 = vdwg.mxu0
    %v1048 = vxor.u32 %v1046, 2147483648
    %v1049 = vmul.f32 %v1048, 1.442695
    %v1050 = vpow.pop %v1049
    %v1051 = vadd.f32 %v1050, 1.0
    %v1052 = vrcp.pop %v1051
    %v1053 = vmul.f32 %v1051, %v1052
    %v1054 = vsub.f32 1.0, %v1053
    %v1055 = vmul.f32 %v1052, %v1054
    %v1056 = vadd.f32 %v1052, %v1055
    %vm1057 = vweird.f32 %v1051
    %vm1058 = vweird.f32 %v1052
    %vm1059 = vmor %vm1057, %vm1058
    %v1060 = vsel %vm1059, %v1052, %v1056
    %v1061 = vand.u32 2147483647, %v1051
    %vm1062 = vcmp.eq.f32.partialorder %v1061, 8.507059e+37
    %v1063 = vand.u32 %v1051, 2147483648
    %v1064 = vor.u32 1.1754944e-38, %v1063
    %v1065 = vsel %vm1062, %v1064, %v1060
    %v1066 = vmul.f32 1.0, %v1065
    %v1067 = vtanh.pop %v1046
    %v1068 = vmul.f32 %v1066, %v943
    %1070 = vrot.lane.b32.xlu0 %v1067, 64
    %v1071 = vpop.permute.xlu0 %1070
    %v1073 = vmul.f32 %v1066, %v1071
    %1075 = vrot.lane.b32.xlu0 %v1073, 32
    %v1076 = vpop.permute.xlu0 %1075
    %v1078 = vadd.f32 %v1068, %v1076
    %v1079 = vtanh.pop %v1078
    %1081 = vrot.lane.b32.xlu0 %v1079, 64
    %v1082 = vpop.permute.xlu0 %1081
    %v1084 = vmul.f32 %v1066, %v1082
    %1086 = vrot.lane.b32.xlu0 %v1084, 32
    %v1087 = vpop.permute.xlu0 %1086
    %1090 = vrot.lane.b32.xlu0 %v1018, 64
    %v1091 = vpop.permute.xlu0 %1090
    %v1093 = vsel %vm143, %v1087, %v1091
    %v1095 = vsel %vm148, %v1093, 0
    %1097 = vmatpush.msra.mxu0 0.0
    %1098 = vmatpush.msra.mxu0 0.0
    %1099 = vmatpush.msra.mxu0 0.0
    %1100 = vmatpush.msra.mxu0 0.0
    %1101 = vmatpush.msra.mxu0 0.0
    %1102 = vmatpush.msra.mxu0 0.0
    %1103 = vmatpush.msra.mxu0 0.0
    %1104 = vmatpush.msra.mxu0 0.0
    %1105 = vmatpush.msra.mxu0 %v70
    %1106 = vmatpush.msra.mxu0 %v69
    %1107 = vmatpush.msra.mxu0 %v68
    %1108 = vmatpush.msra.mxu0 %v67
    %1109 = vmatpush.msra.mxu0 %v66
    %1110 = vmatpush.msra.mxu0 %v65
    %1111 = vmatpush.msra.mxu0 %v64
    %1112 = vmatpush.msra.mxu0 %v63
    %1113 = vmatmul.f32.gmra.mxu0 %v1095
    %v1114 = vpop.f32.mrf.mxu0
    %v1115 = vadd.f32 %v146, %v1114
    %1116 = vdwg.mxu0
    %v1117 = vxor.u32 %v1115, 2147483648
    %v1118 = vmul.f32 %v1117, 1.442695
    %v1119 = vpow.pop %v1118
    %v1120 = vadd.f32 %v1119, 1.0
    %v1121 = vrcp.pop %v1120
    %v1122 = vmul.f32 %v1120, %v1121
    %v1123 = vsub.f32 1.0, %v1122
    %v1124 = vmul.f32 %v1121, %v1123
    %v1125 = vadd.f32 %v1121, %v1124
    %vm1126 = vweird.f32 %v1120
    %vm1127 = vweird.f32 %v1121
    %vm1128 = vmor %vm1126, %vm1127
    %v1129 = vsel %vm1128, %v1121, %v1125
    %v1130 = vand.u32 2147483647, %v1120
    %vm1131 = vcmp.eq.f32.partialorder %v1130, 8.507059e+37
    %v1132 = vand.u32 %v1120, 2147483648
    %v1133 = vor.u32 1.1754944e-38, %v1132
    %v1134 = vsel %vm1131, %v1133, %v1129
    %v1135 = vmul.f32 1.0, %v1134
    %v1136 = vtanh.pop %v1115
    %v1137 = vmul.f32 %v1135, %v1012
    %1139 = vrot.lane.b32.xlu0 %v1136, 64
    %v1140 = vpop.permute.xlu0 %1139
    %v1142 = vmul.f32 %v1135, %v1140
    %1144 = vrot.lane.b32.xlu0 %v1142, 32
    %v1145 = vpop.permute.xlu0 %1144
    %v1147 = vadd.f32 %v1137, %v1145
    %v1148 = vtanh.pop %v1147
    %1150 = vrot.lane.b32.xlu0 %v1148, 64
    %v1151 = vpop.permute.xlu0 %1150
    %v1153 = vmul.f32 %v1135, %v1151
    %v1154 = vrot.slane %v343, 6
    %v1156 = vrot.slane %v478, 4
    %v1158 = vrot.slane %v613, 2
    %v1160 = vrot.slane %v883, 6
    %v1162 = vrot.slane %v1018, 4
    %v1165 = vrot.slane %v1153, 2
    %vm1167 = vcmask 1041408
    %v1168 = vsel %vm1167, %v208, %v1154
    %vm1169 = vcmask 1043456
    %v1170 = vsel %vm1169, %v1168, %v1156
    %vm1171 = vcmask 1045504
    %v1172 = vsel %vm1171, %v1170, %v1158
    %v1173 = vsel %vm1167, %v748, %v1160
    %v1174 = vsel %vm1169, %v1173, %v1162
    %v1175 = vsel %vm1171, %v1174, %v1165
    %v1176 = vld [vmem:[%s5] sm:$0xff]
    %v1177 = vld [vmem:[%s5 + $0x8] sm:$0xff]
    %v1178 = vld [vmem:[%s5 + $0x10] sm:$0xff]
    %v1179 = vld [vmem:[%s5 + $0x18] sm:$0xff]
    %v1180 = vld [vmem:[%s6] sm:$0x1]
    %v1182 = vperm.slane %v1180, 0
    %1186 = vrot.lane.b32.xlu0 %v1172, 32
    %v1187 = vpop.permute.xlu0 %1186
    %1188 = vrot.lane.b32.xlu0 %v1175, 32
    %v1189 = vpop.permute.xlu0 %1188
    %v1190 = vsel %vm143, %v1187, 0
    %v1192 = vsel %vm143, %v1189, 0
    %1194 = vmatpush.msra.mxu0 0.0
    %1195 = vmatpush.msra.mxu0 0.0
    %1196 = vmatpush.msra.mxu0 0.0
    %1197 = vmatpush.msra.mxu0 0.0
    %1198 = vmatpush.msra.mxu0 0.0
    %1199 = vmatpush.msra.mxu0 0.0
    %1200 = vmatpush.msra.mxu0 0.0
    %1201 = vmatpush.msra.mxu0 0.0
    %1202 = vmatpush.msra.mxu0 0.0
    %1203 = vmatpush.msra.mxu0 0.0
    %1204 = vmatpush.msra.mxu0 0.0
    %1205 = vmatpush.msra.mxu0 0.0
    %1206 = vmatpush.msra.mxu0 %v1179
    %1207 = vmatpush.msra.mxu0 %v1178
    %1208 = vmatpush.msra.mxu0 %v1177
    %1209 = vmatpush.msra.mxu0 %v1176
    %1210 = vmatmul.f32.gmra.mxu0 %v1190
    %v1211 = vpop.f32.mrf.mxu0
    %v1212 = vadd.f32 %v1182, %v1211
    %1213 = vmatmul.f32.gmra.mxu0 %v1192
    %v1214 = vpop.f32.mrf.mxu0
    %v1215 = vadd.f32 %v1182, %v1214
    %1216 = vdwg.mxu0
    %vm1217 = vcmask 64512
    %1218 = vst.msk [vmem:[%s7] sm:$0xff] %vm1217, %v1212
    %1219 = vst.msk [vmem:[%s7 + $0x8] sm:$0xff] %vm1217, %v1215
    // Predicated region
    $region38: #{decoder_forward.1} parent=1 // pred_check
      _
    $region39: #{decoder_forward.1} parent=1 // pred_check_branch
      %1221 = sbr.rel (0) target = $region41
    $region40: #{decoder_forward.1} parent=1 // pred_region
      _
    $region41: #{decoder_forward.1} parent=1 // pred_fallthru
      _
    // Predicated region
    $region42: #{decoder_forward.1} parent=1 // pred_check
      _
    $region43: #{decoder_forward.1} parent=1 // pred_check_branch
      %1223 = sbr.rel (0) target = $region45
    $region44: #{decoder_forward.1} parent=1 // pred_region
      _
    $region45: #{decoder_forward.1} parent=1 // pred_fallthru
      _
    %1224 = vsyncpa [#allocation3], 1
    %1225 = vsyncpa [#allocation5], 1

</llo_original>
